<compile_context>
chip_gen: v5e
topology: v5e:2x2
jax: 0.10.0
libtpu: 0.0.40
codegen_flags: <defaults>
</compile_context>

<pallas_src>
import numpy as np

import jax
import jax.numpy as jnp
from jax.experimental import pallas as pl
from jax.experimental.pallas import tpu as pltpu

_BT = 128  # max batch rows per grid step (must stay a multiple of 16)


# ----------------------------------------------------------------------------
# Fused kernel
# ----------------------------------------------------------------------------
def _net_kernel(x_ref, t1_ref, b1_ref, t2_ref, b2_ref,
                wf1_ref, fb1_ref, wf2_ref, fb2_ref, out_ref):
    f32 = jnp.float32
    bf16 = jnp.bfloat16
    bt = out_ref.shape[0]  # batch rows in this tile

    # ---- conv1 (5x5, 1->10) + 2x2 maxpool + ReLU ---------------------------
    # x_ref[m][q*bt + b, dy*28 + w] = image row (4q + m + dy), col w, sample b.
    # dot(x_ref[m], t1)[q*bt+b, rx*128 + px*10 + c]
    #     = conv1[sample b, chan c, row 4q+m, col 2px+rx]      (m = 2s + ry)
    # pooled row py = 2q + s; p1 kept split by pooled-row parity s so conv2's
    # row taps are aligned 16-multiple slices.
    p1 = []
    for s in (0, 1):
        a = jnp.dot(x_ref[2 * s], t1_ref[...], preferred_element_type=f32)
        a = jnp.maximum(a, jnp.dot(x_ref[2 * s + 1], t1_ref[...],
                                   preferred_element_type=f32))    # row pool
        a = jnp.maximum(a[:, :128], a[:, 128:])                    # col pool
        p1.append(jnp.maximum(a + b1_ref[...], 0.0).astype(bf16))  # (6bt,128)

    # ---- conv2 (5x5, 10->20) + 2x2 maxpool + ReLU  (Dropout2d: identity) ---
    pooled2 = None
    for ry2 in (0, 1):
        acc = None
        for dy in range(5):
            s_in = (ry2 + dy) % 2
            off = (ry2 + dy) // 2
            d = jnp.dot(p1[s_in][off * bt:(off + 4) * bt, :], t2_ref[dy],
                        preferred_element_type=f32)                # (4bt,256)
            acc = d if acc is None else acc + d
        pooled2 = acc if pooled2 is None else jnp.maximum(pooled2, acc)
    pooled2 = jnp.maximum(pooled2[:, :128], pooled2[:, 128:])      # col pool
    p2 = jnp.maximum(pooled2 + b2_ref[...], 0.0).astype(bf16)      # (4bt,128)

    # ---- fc1 + ReLU  (F.dropout: identity in eval) -------------------------
    h = None
    for py2 in range(4):
        d = jnp.dot(p2[py2 * bt:(py2 + 1) * bt, :], wf1_ref[py2],
                    preferred_element_type=f32)
        h = d if h is None else h + d
    h = jnp.maximum(h + fb1_ref[...], 0.0).astype(bf16)            # (bt,128)

    # ---- fc2 + log_softmax --------------------------------------------------
    logits = jnp.dot(h, wf2_ref[...], preferred_element_type=f32) + fb2_ref[...]
    z = logits - jnp.max(logits, axis=-1, keepdims=True)
    lse = jnp.log(jnp.sum(jnp.exp(z), axis=-1, keepdims=True))
    out_ref[...] = (z - lse).astype(out_ref.dtype)


# ----------------------------------------------------------------------------
# One-time weight preparation (tiny arrays; done once, outside the hot path)
# ----------------------------------------------------------------------------
def prepare_params(params):
    w1 = np.asarray(params["conv1_w"], np.float32)   # (10, 1, 5, 5)
    b1 = np.asarray(params["conv1_b"], np.float32)   # (10,)
    w2 = np.asarray(params["conv2_w"], np.float32)   # (20, 10, 5, 5)
    b2 = np.asarray(params["conv2_b"], np.float32)   # (20,)
    fw1 = np.asarray(params["fc1_w"], np.float32)    # (50, 320)
    fb1 = np.asarray(params["fc1_b"], np.float32)    # (50,)
    fw2 = np.asarray(params["fc2_w"], np.float32)    # (10, 50)
    fb2 = np.asarray(params["fc2_b"], np.float32)    # (10,)

    # conv1 Toeplitz: kernel row dy folded into K (k = dy*28 + w), output
    # column parity rx folded into the 256-lane N (rx=0 -> [0:120),
    # rx=1 -> [128:248)):
    #   t1[dy*28+w, rx*128 + px*10 + c] = w1[c, 0, dy, w - 2px - rx]
    t1 = np.zeros((5, 28, 256), np.float32)
    for dyi in range(5):
        for px in range(12):
            for rx in range(2):
                for dx in range(5):
                    w = 2 * px + rx + dx                  # always 0..27
                    n0 = rx * 128 + px * 10
                    t1[dyi, w, n0:n0 + 10] = w1[:, 0, dyi, dx]
    t1 = t1.reshape(140, 256)

    # conv2 Toeplitz per kernel row dy; K = pooled-input (col, chan) padded to
    # 128; N = rx2*128 + px2*20 + co:
    #   t2[dy, pin*10+ci, rx2*128 + px2*20 + co] = w2[co, ci, dy, pin-2px2-rx2]
    t2 = np.zeros((5, 128, 256), np.float32)
    for dyi in range(5):
        for px2 in range(4):
            for rx2 in range(2):
                for dx in range(5):
                    pin = 2 * px2 + rx2 + dx              # always 0..11
                    n0 = rx2 * 128 + px2 * 20
                    for ci in range(10):
                        t2[dyi, pin * 10 + ci, n0:n0 + 20] = w2[:, ci, dyi, dx]

    # fc1 weight in the kernel's (px2, co) lane order, split by pooled row py2
    # (PyTorch NCHW flatten: f = co*16 + py2*4 + px2); N zero-padded to 128.
    wf1 = np.zeros((4, 128, 128), np.float32)
    for py2 in range(4):
        for px2 in range(4):
            for co in range(20):
                wf1[py2, px2 * 20 + co, :50] = fw1[:, co * 16 + py2 * 4 + px2]

    wf2 = np.zeros((128, 10), np.float32)
    wf2[:50, :] = fw2.T

    b1p = np.zeros((1, 128), np.float32)
    b1p[0, :120] = np.tile(b1, 12)
    b2p = np.zeros((1, 128), np.float32)
    b2p[0, :80] = np.tile(b2, 4)
    fb1p = np.zeros((1, 128), np.float32)
    fb1p[0, :50] = fb1

    return dict(
        t1=jnp.asarray(t1, jnp.bfloat16), b1=jnp.asarray(b1p),
        t2=jnp.asarray(t2, jnp.bfloat16), b2=jnp.asarray(b2p),
        wf1=jnp.asarray(wf1, jnp.bfloat16), fb1=jnp.asarray(fb1p),
        wf2=jnp.asarray(wf2, jnp.bfloat16), fb2=jnp.asarray(fb2.reshape(1, 10)),
    )


# ----------------------------------------------------------------------------
# Forward pass (inference)
# ----------------------------------------------------------------------------
def net_forward(x, kp, block_batch=None):
    N = x.shape[0]
    assert x.shape[1:] == (1, 28, 28), "fc1 expects 20*4*4 features -> 28x28 in"
    if block_batch is None:
        if N <= 16:
            block_batch = 16
        else:
            # multiple of 16 (bf16 packed sublanes), >=2 grid steps so both
            # v7x TensorCores get work, capped at _BT to bound padded waste.
            block_batch = min(_BT, 16 * ((N + 31) // 32))
    bt = block_batch
    assert bt % 16 == 0
    grid_n = (N + bt - 1) // bt
    n_pad = grid_n * bt

    xf = x.reshape(N, 28, 28).astype(jnp.float32)
    if n_pad != N:
        xf = jnp.pad(xf, ((0, n_pad - N), (0, 0), (0, 0)))

    # Single host-side relayout ("im2row over rows"), lane-dense bf16 slabs:
    #   x4[i*4 + m][q*bt + b, dy*28 + w] = x[i*bt + b, 4q + m + dy, w]
    # so every in-kernel conv1 operand is one full aligned block.
    ridx = (4 * np.arange(6)[:, None, None] + np.arange(4)[None, :, None]
            + np.arange(5)[None, None, :])               # (q=6, m=4, dy=5)
    xg = xf[:, ridx, :]                                  # (n_pad, 6, 4, 5, 28)
    x4 = (xg.reshape(grid_n, bt, 6, 4, 5, 28)
            .transpose(0, 3, 2, 1, 4, 5)                 # (i, m, q, b, dy, w)
            .reshape(grid_n * 4, 6 * bt, 140)
            .astype(jnp.bfloat16))

    out = pl.pallas_call(
        _net_kernel,
        out_shape=jax.ShapeDtypeStruct((n_pad, 10), jnp.float32),
        grid=(grid_n,),
        in_specs=[
            pl.BlockSpec((4, 6 * bt, 140), lambda i: (i, 0, 0)),
            pl.BlockSpec((140, 256), lambda i: (0, 0)),
            pl.BlockSpec((1, 128), lambda i: (0, 0)),
            pl.BlockSpec((5, 128, 256), lambda i: (0, 0, 0)),
            pl.BlockSpec((1, 128), lambda i: (0, 0)),
            pl.BlockSpec((4, 128, 128), lambda i: (0, 0, 0)),
            pl.BlockSpec((1, 128), lambda i: (0, 0)),
            pl.BlockSpec((128, 10), lambda i: (0, 0)),
            pl.BlockSpec((1, 10), lambda i: (0, 0)),
        ],
        out_specs=pl.BlockSpec((bt, 10), lambda i: (i, 0)),
        compiler_params=pltpu.CompilerParams(
            dimension_semantics=("parallel",),
            vmem_limit_bytes=32 * 1024 * 1024,
        ),
    )(x4, kp["t1"], kp["b1"], kp["t2"], kp["b2"],
      kp["wf1"], kp["fb1"], kp["wf2"], kp["fb2"])
    return out[:N]


# ----------------------------------------------------------------------------
# Pure-JAX reference (loose numerical self-check) and param init
# ----------------------------------------------------------------------------
def net_forward_ref(x, params):
    y = jax.lax.conv_general_dilated(
        x, params["conv1_w"], window_strides=(1, 1), padding="VALID",
        dimension_numbers=("NCHW", "OIHW", "NCHW"))
    y = y + params["conv1_b"][None, :, None, None]
    n, ch, hh, ww = y.shape
    y = jnp.maximum(y.reshape(n, ch, hh // 2, 2, ww // 2, 2).max(axis=(3, 5)), 0.0)
    y = jax.lax.conv_general_dilated(
        y, params["conv2_w"], window_strides=(1, 1), padding="VALID",
        dimension_numbers=("NCHW", "OIHW", "NCHW"))
    y = y + params["conv2_b"][None, :, None, None]
    n, ch, hh, ww = y.shape
    y = jnp.maximum(y.reshape(n, ch, hh // 2, 2, ww // 2, 2).max(axis=(3, 5)), 0.0)
    y = y.reshape(n, 320)
    h = jnp.maximum(y @ params["fc1_w"].T + params["fc1_b"], 0.0)
    logits = h @ params["fc2_w"].T + params["fc2_b"]
    return jax.nn.log_softmax(logits, axis=-1)


def init_params(key):
    ks = jax.random.split(key, 8)
    scale = 0.05
    return {
        "conv1_w": scale * jax.random.normal(ks[0], (10, 1, 5, 5), jnp.float32),
        "conv1_b": scale * jax.random.normal(ks[1], (10,), jnp.float32),
        "conv2_w": scale * jax.random.normal(ks[2], (20, 10, 5, 5), jnp.float32),
        "conv2_b": scale * jax.random.normal(ks[3], (20,), jnp.float32),
        "fc1_w": scale * jax.random.normal(ks[4], (50, 320), jnp.float32),
        "fc1_b": scale * jax.random.normal(ks[5], (50,), jnp.float32),
        "fc2_w": scale * jax.random.normal(ks[6], (10, 50), jnp.float32),
        "fc2_b": scale * jax.random.normal(ks[7], (10,), jnp.float32),
    }


if __name__ == "__main__":
    key = jax.random.PRNGKey(0)
    kx, kp_key = jax.random.split(key)
    # 28x28 spatial is required by the module (fc1 expects 20*4*4 = 320 feats)
    x = jax.random.normal(kx, (2, 1, 28, 28), jnp.float32)
    params = init_params(kp_key)
    kparams = prepare_params(params)   # one-time weight re-layout

    out = jax.block_until_ready(jax.jit(net_forward)(x, kparams))
    assert out.shape == (2, 10)
    assert bool(jnp.all(jnp.isfinite(out)))
    assert bool(jnp.allclose(jnp.sum(jnp.exp(out), axis=-1), 1.0, atol=1e-3))
    # loose check against a pure-JAX f32 reference (kernel uses bf16 matmuls)
    ref = net_forward_ref(x, params)
    err = float(jnp.max(jnp.abs(out - ref)))
    assert err < 0.1, f"mismatch vs reference: {err}"
    print("KERNEL_OK")
</pallas_src>

<mosaic_0001>
module attributes {stable_mosaic.version = 11 : i64} {
  func.func @_net_kernel(%arg0: i32, %arg1: memref<4x96x140xbf16, #tpu.memory_space<vmem>>, %arg2: memref<140x256xbf16, #tpu.memory_space<vmem>>, %arg3: memref<1x128xf32, #tpu.memory_space<vmem>>, %arg4: memref<5x128x256xbf16, #tpu.memory_space<vmem>>, %arg5: memref<1x128xf32, #tpu.memory_space<vmem>>, %arg6: memref<4x128x128xbf16, #tpu.memory_space<vmem>>, %arg7: memref<1x128xf32, #tpu.memory_space<vmem>>, %arg8: memref<128x10xbf16, #tpu.memory_space<vmem>>, %arg9: memref<1x10xf32, #tpu.memory_space<vmem>>, %arg10: memref<16x10xf32, #tpu.memory_space<vmem>>) attributes {dimension_semantics = [#tpu.dimension_semantics<parallel>], iteration_bounds = array<i64: 1>, scalar_prefetch = 0 : i64, scratch_operands = 0 : i64, tpu.core_type = #tpu.core_type<tc>, window_params = [{transform_indices = @transform_0, window_bounds = array<i64: 4, 96, 140>}, {pipeline_mode = #tpu.pipeline_mode<synchronous>, transform_indices = @transform_1, window_bounds = array<i64: 140, 256>}, {pipeline_mode = #tpu.pipeline_mode<synchronous>, transform_indices = @transform_2, window_bounds = array<i64: 1, 128>}, {pipeline_mode = #tpu.pipeline_mode<synchronous>, transform_indices = @transform_3, window_bounds = array<i64: 5, 128, 256>}, {pipeline_mode = #tpu.pipeline_mode<synchronous>, transform_indices = @transform_4, window_bounds = array<i64: 1, 128>}, {pipeline_mode = #tpu.pipeline_mode<synchronous>, transform_indices = @transform_5, window_bounds = array<i64: 4, 128, 128>}, {pipeline_mode = #tpu.pipeline_mode<synchronous>, transform_indices = @transform_6, window_bounds = array<i64: 1, 128>}, {pipeline_mode = #tpu.pipeline_mode<synchronous>, transform_indices = @transform_7, window_bounds = array<i64: 128, 10>}, {pipeline_mode = #tpu.pipeline_mode<synchronous>, transform_indices = @transform_8, window_bounds = array<i64: 1, 10>}, {transform_indices = @transform_9, window_bounds = array<i64: 16, 10>}]} {
    %c0 = arith.constant 0 : index
    %c0_0 = arith.constant 0 : index
    %c0_1 = arith.constant 0 : index
    %0 = vector.load %arg1[%c0, %c0_0, %c0_1] : memref<4x96x140xbf16, #tpu.memory_space<vmem>>, vector<1x96x140xbf16>
    %1 = vector.shape_cast %0 : vector<1x96x140xbf16> to vector<96x140xbf16>
    %c0_2 = arith.constant 0 : index
    %c0_3 = arith.constant 0 : index
    %2 = vector.load %arg2[%c0_2, %c0_3] : memref<140x256xbf16, #tpu.memory_space<vmem>>, vector<140x256xbf16>
    %cst = arith.constant dense<0.000000e+00> : vector<96x256xf32>
    %3 = tpu.matmul %1, %2, %cst {dimension_numbers = #tpu.dot_dimension_numbers<[1], [0], [0], [1], [0, 0, 1, 1], [], []>} : vector<96x140xbf16>, vector<140x256xbf16>, vector<96x256xf32> -> vector<96x256xf32>
    %c1 = arith.constant 1 : index
    %c0_4 = arith.constant 0 : index
    %c0_5 = arith.constant 0 : index
    %4 = vector.load %arg1[%c1, %c0_4, %c0_5] : memref<4x96x140xbf16, #tpu.memory_space<vmem>>, vector<1x96x140xbf16>
    %5 = vector.shape_cast %4 : vector<1x96x140xbf16> to vector<96x140xbf16>
    %c0_6 = arith.constant 0 : index
    %c0_7 = arith.constant 0 : index
    %6 = vector.load %arg2[%c0_6, %c0_7] : memref<140x256xbf16, #tpu.memory_space<vmem>>, vector<140x256xbf16>
    %cst_8 = arith.constant dense<0.000000e+00> : vector<96x256xf32>
    %7 = tpu.matmul %5, %6, %cst_8 {dimension_numbers = #tpu.dot_dimension_numbers<[1], [0], [0], [1], [0, 0, 1, 1], [], []>} : vector<96x140xbf16>, vector<140x256xbf16>, vector<96x256xf32> -> vector<96x256xf32>
    %8 = arith.maximumf %3, %7 : vector<96x256xf32>
    %9 = vector.extract_strided_slice %8 {offsets = [0, 0], sizes = [96, 128], strides = [1, 1]} : vector<96x256xf32> to vector<96x128xf32>
    %10 = vector.extract_strided_slice %8 {offsets = [0, 128], sizes = [96, 128], strides = [1, 1]} : vector<96x256xf32> to vector<96x128xf32>
    %11 = arith.maximumf %9, %10 : vector<96x128xf32>
    %c0_9 = arith.constant 0 : index
    %c0_10 = arith.constant 0 : index
    %12 = vector.load %arg3[%c0_9, %c0_10] : memref<1x128xf32, #tpu.memory_space<vmem>>, vector<1x128xf32>
    %13 = vector.broadcast %12 : vector<1x128xf32> to vector<96x128xf32>
    %14 = arith.addf %11, %13 : vector<96x128xf32>
    %cst_11 = arith.constant 0.000000e+00 : f32
    %15 = vector.broadcast %cst_11 : f32 to vector<96x128xf32>
    %16 = arith.maximumf %14, %15 : vector<96x128xf32>
    %17 = arith.truncf %16 : vector<96x128xf32> to vector<96x128xbf16>
    %c2 = arith.constant 2 : index
    %c0_12 = arith.constant 0 : index
    %c0_13 = arith.constant 0 : index
    %18 = vector.load %arg1[%c2, %c0_12, %c0_13] : memref<4x96x140xbf16, #tpu.memory_space<vmem>>, vector<1x96x140xbf16>
    %19 = vector.shape_cast %18 : vector<1x96x140xbf16> to vector<96x140xbf16>
    %c0_14 = arith.constant 0 : index
    %c0_15 = arith.constant 0 : index
    %20 = vector.load %arg2[%c0_14, %c0_15] : memref<140x256xbf16, #tpu.memory_space<vmem>>, vector<140x256xbf16>
    %cst_16 = arith.constant dense<0.000000e+00> : vector<96x256xf32>
    %21 = tpu.matmul %19, %20, %cst_16 {dimension_numbers = #tpu.dot_dimension_numbers<[1], [0], [0], [1], [0, 0, 1, 1], [], []>} : vector<96x140xbf16>, vector<140x256xbf16>, vector<96x256xf32> -> vector<96x256xf32>
    %c3 = arith.constant 3 : index
    %c0_17 = arith.constant 0 : index
    %c0_18 = arith.constant 0 : index
    %22 = vector.load %arg1[%c3, %c0_17, %c0_18] : memref<4x96x140xbf16, #tpu.memory_space<vmem>>, vector<1x96x140xbf16>
    %23 = vector.shape_cast %22 : vector<1x96x140xbf16> to vector<96x140xbf16>
    %c0_19 = arith.constant 0 : index
    %c0_20 = arith.constant 0 : index
    %24 = vector.load %arg2[%c0_19, %c0_20] : memref<140x256xbf16, #tpu.memory_space<vmem>>, vector<140x256xbf16>
    %cst_21 = arith.constant dense<0.000000e+00> : vector<96x256xf32>
    %25 = tpu.matmul %23, %24, %cst_21 {dimension_numbers = #tpu.dot_dimension_numbers<[1], [0], [0], [1], [0, 0, 1, 1], [], []>} : vector<96x140xbf16>, vector<140x256xbf16>, vector<96x256xf32> -> vector<96x256xf32>
    %26 = arith.maximumf %21, %25 : vector<96x256xf32>
    %27 = vector.extract_strided_slice %26 {offsets = [0, 0], sizes = [96, 128], strides = [1, 1]} : vector<96x256xf32> to vector<96x128xf32>
    %28 = vector.extract_strided_slice %26 {offsets = [0, 128], sizes = [96, 128], strides = [1, 1]} : vector<96x256xf32> to vector<96x128xf32>
    %29 = arith.maximumf %27, %28 : vector<96x128xf32>
    %c0_22 = arith.constant 0 : index
    %c0_23 = arith.constant 0 : index
    %30 = vector.load %arg3[%c0_22, %c0_23] : memref<1x128xf32, #tpu.memory_space<vmem>>, vector<1x128xf32>
    %31 = vector.broadcast %30 : vector<1x128xf32> to vector<96x128xf32>
    %32 = arith.addf %29, %31 : vector<96x128xf32>
    %cst_24 = arith.constant 0.000000e+00 : f32
    %33 = vector.broadcast %cst_24 : f32 to vector<96x128xf32>
    %34 = arith.maximumf %32, %33 : vector<96x128xf32>
    %35 = arith.truncf %34 : vector<96x128xf32> to vector<96x128xbf16>
    %36 = vector.extract_strided_slice %17 {offsets = [0, 0], sizes = [64, 128], strides = [1, 1]} : vector<96x128xbf16> to vector<64x128xbf16>
    %c0_25 = arith.constant 0 : index
    %c0_26 = arith.constant 0 : index
    %c0_27 = arith.constant 0 : index
    %37 = vector.load %arg4[%c0_25, %c0_26, %c0_27] : memref<5x128x256xbf16, #tpu.memory_space<vmem>>, vector<1x128x256xbf16>
    %38 = vector.shape_cast %37 : vector<1x128x256xbf16> to vector<128x256xbf16>
    %cst_28 = arith.constant dense<0.000000e+00> : vector<64x256xf32>
    %39 = tpu.matmul %36, %38, %cst_28 {dimension_numbers = #tpu.dot_dimension_numbers<[1], [0], [0], [1], [0, 0, 1, 1], [], []>} : vector<64x128xbf16>, vector<128x256xbf16>, vector<64x256xf32> -> vector<64x256xf32>
    %40 = vector.extract_strided_slice %35 {offsets = [0, 0], sizes = [64, 128], strides = [1, 1]} : vector<96x128xbf16> to vector<64x128xbf16>
    %c1_29 = arith.constant 1 : index
    %c0_30 = arith.constant 0 : index
    %c0_31 = arith.constant 0 : index
    %41 = vector.load %arg4[%c1_29, %c0_30, %c0_31] : memref<5x128x256xbf16, #tpu.memory_space<vmem>>, vector<1x128x256xbf16>
    %42 = vector.shape_cast %41 : vector<1x128x256xbf16> to vector<128x256xbf16>
    %cst_32 = arith.constant dense<0.000000e+00> : vector<64x256xf32>
    %43 = tpu.matmul %40, %42, %cst_32 {dimension_numbers = #tpu.dot_dimension_numbers<[1], [0], [0], [1], [0, 0, 1, 1], [], []>} : vector<64x128xbf16>, vector<128x256xbf16>, vector<64x256xf32> -> vector<64x256xf32>
    %44 = arith.addf %39, %43 : vector<64x256xf32>
    %45 = vector.extract_strided_slice %17 {offsets = [16, 0], sizes = [64, 128], strides = [1, 1]} : vector<96x128xbf16> to vector<64x128xbf16>
    %c2_33 = arith.constant 2 : index
    %c0_34 = arith.constant 0 : index
    %c0_35 = arith.constant 0 : index
    %46 = vector.load %arg4[%c2_33, %c0_34, %c0_35] : memref<5x128x256xbf16, #tpu.memory_space<vmem>>, vector<1x128x256xbf16>
    %47 = vector.shape_cast %46 : vector<1x128x256xbf16> to vector<128x256xbf16>
    %cst_36 = arith.constant dense<0.000000e+00> : vector<64x256xf32>
    %48 = tpu.matmul %45, %47, %cst_36 {dimension_numbers = #tpu.dot_dimension_numbers<[1], [0], [0], [1], [0, 0, 1, 1], [], []>} : vector<64x128xbf16>, vector<128x256xbf16>, vector<64x256xf32> -> vector<64x256xf32>
    %49 = arith.addf %44, %48 : vector<64x256xf32>
    %50 = vector.extract_strided_slice %35 {offsets = [16, 0], sizes = [64, 128], strides = [1, 1]} : vector<96x128xbf16> to vector<64x128xbf16>
    %c3_37 = arith.constant 3 : index
    %c0_38 = arith.constant 0 : index
    %c0_39 = arith.constant 0 : index
    %51 = vector.load %arg4[%c3_37, %c0_38, %c0_39] : memref<5x128x256xbf16, #tpu.memory_space<vmem>>, vector<1x128x256xbf16>
    %52 = vector.shape_cast %51 : vector<1x128x256xbf16> to vector<128x256xbf16>
    %cst_40 = arith.constant dense<0.000000e+00> : vector<64x256xf32>
    %53 = tpu.matmul %50, %52, %cst_40 {dimension_numbers = #tpu.dot_dimension_numbers<[1], [0], [0], [1], [0, 0, 1, 1], [], []>} : vector<64x128xbf16>, vector<128x256xbf16>, vector<64x256xf32> -> vector<64x256xf32>
    %54 = arith.addf %49, %53 : vector<64x256xf32>
    %55 = vector.extract_strided_slice %17 {offsets = [32, 0], sizes = [64, 128], strides = [1, 1]} : vector<96x128xbf16> to vector<64x128xbf16>
    %c4 = arith.constant 4 : index
    %c0_41 = arith.constant 0 : index
    %c0_42 = arith.constant 0 : index
    %56 = vector.load %arg4[%c4, %c0_41, %c0_42] : memref<5x128x256xbf16, #tpu.memory_space<vmem>>, vector<1x128x256xbf16>
    %57 = vector.shape_cast %56 : vector<1x128x256xbf16> to vector<128x256xbf16>
    %cst_43 = arith.constant dense<0.000000e+00> : vector<64x256xf32>
    %58 = tpu.matmul %55, %57, %cst_43 {dimension_numbers = #tpu.dot_dimension_numbers<[1], [0], [0], [1], [0, 0, 1, 1], [], []>} : vector<64x128xbf16>, vector<128x256xbf16>, vector<64x256xf32> -> vector<64x256xf32>
    %59 = arith.addf %54, %58 : vector<64x256xf32>
    %60 = vector.extract_strided_slice %35 {offsets = [0, 0], sizes = [64, 128], strides = [1, 1]} : vector<96x128xbf16> to vector<64x128xbf16>
    %c0_44 = arith.constant 0 : index
    %c0_45 = arith.constant 0 : index
    %c0_46 = arith.constant 0 : index
    %61 = vector.load %arg4[%c0_44, %c0_45, %c0_46] : memref<5x128x256xbf16, #tpu.memory_space<vmem>>, vector<1x128x256xbf16>
    %62 = vector.shape_cast %61 : vector<1x128x256xbf16> to vector<128x256xbf16>
    %cst_47 = arith.constant dense<0.000000e+00> : vector<64x256xf32>
    %63 = tpu.matmul %60, %62, %cst_47 {dimension_numbers = #tpu.dot_dimension_numbers<[1], [0], [0], [1], [0, 0, 1, 1], [], []>} : vector<64x128xbf16>, vector<128x256xbf16>, vector<64x256xf32> -> vector<64x256xf32>
    %64 = vector.extract_strided_slice %17 {offsets = [16, 0], sizes = [64, 128], strides = [1, 1]} : vector<96x128xbf16> to vector<64x128xbf16>
    %c1_48 = arith.constant 1 : index
    %c0_49 = arith.constant 0 : index
    %c0_50 = arith.constant 0 : index
    %65 = vector.load %arg4[%c1_48, %c0_49, %c0_50] : memref<5x128x256xbf16, #tpu.memory_space<vmem>>, vector<1x128x256xbf16>
    %66 = vector.shape_cast %65 : vector<1x128x256xbf16> to vector<128x256xbf16>
    %cst_51 = arith.constant dense<0.000000e+00> : vector<64x256xf32>
    %67 = tpu.matmul %64, %66, %cst_51 {dimension_numbers = #tpu.dot_dimension_numbers<[1], [0], [0], [1], [0, 0, 1, 1], [], []>} : vector<64x128xbf16>, vector<128x256xbf16>, vector<64x256xf32> -> vector<64x256xf32>
    %68 = arith.addf %63, %67 : vector<64x256xf32>
    %69 = vector.extract_strided_slice %35 {offsets = [16, 0], sizes = [64, 128], strides = [1, 1]} : vector<96x128xbf16> to vector<64x128xbf16>
    %c2_52 = arith.constant 2 : index
    %c0_53 = arith.constant 0 : index
    %c0_54 = arith.constant 0 : index
    %70 = vector.load %arg4[%c2_52, %c0_53, %c0_54] : memref<5x128x256xbf16, #tpu.memory_space<vmem>>, vector<1x128x256xbf16>
    %71 = vector.shape_cast %70 : vector<1x128x256xbf16> to vector<128x256xbf16>
    %cst_55 = arith.constant dense<0.000000e+00> : vector<64x256xf32>
    %72 = tpu.matmul %69, %71, %cst_55 {dimension_numbers = #tpu.dot_dimension_numbers<[1], [0], [0], [1], [0, 0, 1, 1], [], []>} : vector<64x128xbf16>, vector<128x256xbf16>, vector<64x256xf32> -> vector<64x256xf32>
    %73 = arith.addf %68, %72 : vector<64x256xf32>
    %74 = vector.extract_strided_slice %17 {offsets = [32, 0], sizes = [64, 128], strides = [1, 1]} : vector<96x128xbf16> to vector<64x128xbf16>
    %c3_56 = arith.constant 3 : index
    %c0_57 = arith.constant 0 : index
    %c0_58 = arith.constant 0 : index
    %75 = vector.load %arg4[%c3_56, %c0_57, %c0_58] : memref<5x128x256xbf16, #tpu.memory_space<vmem>>, vector<1x128x256xbf16>
    %76 = vector.shape_cast %75 : vector<1x128x256xbf16> to vector<128x256xbf16>
    %cst_59 = arith.constant dense<0.000000e+00> : vector<64x256xf32>
    %77 = tpu.matmul %74, %76, %cst_59 {dimension_numbers = #tpu.dot_dimension_numbers<[1], [0], [0], [1], [0, 0, 1, 1], [], []>} : vector<64x128xbf16>, vector<128x256xbf16>, vector<64x256xf32> -> vector<64x256xf32>
    %78 = arith.addf %73, %77 : vector<64x256xf32>
    %79 = vector.extract_strided_slice %35 {offsets = [32, 0], sizes = [64, 128], strides = [1, 1]} : vector<96x128xbf16> to vector<64x128xbf16>
    %c4_60 = arith.constant 4 : index
    %c0_61 = arith.constant 0 : index
    %c0_62 = arith.constant 0 : index
    %80 = vector.load %arg4[%c4_60, %c0_61, %c0_62] : memref<5x128x256xbf16, #tpu.memory_space<vmem>>, vector<1x128x256xbf16>
    %81 = vector.shape_cast %80 : vector<1x128x256xbf16> to vector<128x256xbf16>
    %cst_63 = arith.constant dense<0.000000e+00> : vector<64x256xf32>
    %82 = tpu.matmul %79, %81, %cst_63 {dimension_numbers = #tpu.dot_dimension_numbers<[1], [0], [0], [1], [0, 0, 1, 1], [], []>} : vector<64x128xbf16>, vector<128x256xbf16>, vector<64x256xf32> -> vector<64x256xf32>
    %83 = arith.addf %78, %82 : vector<64x256xf32>
    %84 = arith.maximumf %59, %83 : vector<64x256xf32>
    %85 = vector.extract_strided_slice %84 {offsets = [0, 0], sizes = [64, 128], strides = [1, 1]} : vector<64x256xf32> to vector<64x128xf32>
    %86 = vector.extract_strided_slice %84 {offsets = [0, 128], sizes = [64, 128], strides = [1, 1]} : vector<64x256xf32> to vector<64x128xf32>
    %87 = arith.maximumf %85, %86 : vector<64x128xf32>
    %c0_64 = arith.constant 0 : index
    %c0_65 = arith.constant 0 : index
    %88 = vector.load %arg5[%c0_64, %c0_65] : memref<1x128xf32, #tpu.memory_space<vmem>>, vector<1x128xf32>
    %89 = vector.broadcast %88 : vector<1x128xf32> to vector<64x128xf32>
    %90 = arith.addf %87, %89 : vector<64x128xf32>
    %cst_66 = arith.constant 0.000000e+00 : f32
    %91 = vector.broadcast %cst_66 : f32 to vector<64x128xf32>
    %92 = arith.maximumf %90, %91 : vector<64x128xf32>
    %93 = arith.truncf %92 : vector<64x128xf32> to vector<64x128xbf16>
    %94 = vector.extract_strided_slice %93 {offsets = [0, 0], sizes = [16, 128], strides = [1, 1]} : vector<64x128xbf16> to vector<16x128xbf16>
    %c0_67 = arith.constant 0 : index
    %c0_68 = arith.constant 0 : index
    %c0_69 = arith.constant 0 : index
    %95 = vector.load %arg6[%c0_67, %c0_68, %c0_69] : memref<4x128x128xbf16, #tpu.memory_space<vmem>>, vector<1x128x128xbf16>
    %96 = vector.shape_cast %95 : vector<1x128x128xbf16> to vector<128x128xbf16>
    %cst_70 = arith.constant dense<0.000000e+00> : vector<16x128xf32>
    %97 = tpu.matmul %94, %96, %cst_70 {dimension_numbers = #tpu.dot_dimension_numbers<[1], [0], [0], [1], [0, 0, 1, 1], [], []>} : vector<16x128xbf16>, vector<128x128xbf16>, vector<16x128xf32> -> vector<16x128xf32>
    %98 = vector.extract_strided_slice %93 {offsets = [16, 0], sizes = [16, 128], strides = [1, 1]} : vector<64x128xbf16> to vector<16x128xbf16>
    %c1_71 = arith.constant 1 : index
    %c0_72 = arith.constant 0 : index
    %c0_73 = arith.constant 0 : index
    %99 = vector.load %arg6[%c1_71, %c0_72, %c0_73] : memref<4x128x128xbf16, #tpu.memory_space<vmem>>, vector<1x128x128xbf16>
    %100 = vector.shape_cast %99 : vector<1x128x128xbf16> to vector<128x128xbf16>
    %cst_74 = arith.constant dense<0.000000e+00> : vector<16x128xf32>
    %101 = tpu.matmul %98, %100, %cst_74 {dimension_numbers = #tpu.dot_dimension_numbers<[1], [0], [0], [1], [0, 0, 1, 1], [], []>} : vector<16x128xbf16>, vector<128x128xbf16>, vector<16x128xf32> -> vector<16x128xf32>
    %102 = arith.addf %97, %101 : vector<16x128xf32>
    %103 = vector.extract_strided_slice %93 {offsets = [32, 0], sizes = [16, 128], strides = [1, 1]} : vector<64x128xbf16> to vector<16x128xbf16>
    %c2_75 = arith.constant 2 : index
    %c0_76 = arith.constant 0 : index
    %c0_77 = arith.constant 0 : index
    %104 = vector.load %arg6[%c2_75, %c0_76, %c0_77] : memref<4x128x128xbf16, #tpu.memory_space<vmem>>, vector<1x128x128xbf16>
    %105 = vector.shape_cast %104 : vector<1x128x128xbf16> to vector<128x128xbf16>
    %cst_78 = arith.constant dense<0.000000e+00> : vector<16x128xf32>
    %106 = tpu.matmul %103, %105, %cst_78 {dimension_numbers = #tpu.dot_dimension_numbers<[1], [0], [0], [1], [0, 0, 1, 1], [], []>} : vector<16x128xbf16>, vector<128x128xbf16>, vector<16x128xf32> -> vector<16x128xf32>
    %107 = arith.addf %102, %106 : vector<16x128xf32>
    %108 = vector.extract_strided_slice %93 {offsets = [48, 0], sizes = [16, 128], strides = [1, 1]} : vector<64x128xbf16> to vector<16x128xbf16>
    %c3_79 = arith.constant 3 : index
    %c0_80 = arith.constant 0 : index
    %c0_81 = arith.constant 0 : index
    %109 = vector.load %arg6[%c3_79, %c0_80, %c0_81] : memref<4x128x128xbf16, #tpu.memory_space<vmem>>, vector<1x128x128xbf16>
    %110 = vector.shape_cast %109 : vector<1x128x128xbf16> to vector<128x128xbf16>
    %cst_82 = arith.constant dense<0.000000e+00> : vector<16x128xf32>
    %111 = tpu.matmul %108, %110, %cst_82 {dimension_numbers = #tpu.dot_dimension_numbers<[1], [0], [0], [1], [0, 0, 1, 1], [], []>} : vector<16x128xbf16>, vector<128x128xbf16>, vector<16x128xf32> -> vector<16x128xf32>
    %112 = arith.addf %107, %111 : vector<16x128xf32>
    %c0_83 = arith.constant 0 : index
    %c0_84 = arith.constant 0 : index
    %113 = vector.load %arg7[%c0_83, %c0_84] : memref<1x128xf32, #tpu.memory_space<vmem>>, vector<1x128xf32>
    %114 = vector.broadcast %113 : vector<1x128xf32> to vector<16x128xf32>
    %115 = arith.addf %112, %114 : vector<16x128xf32>
    %cst_85 = arith.constant 0.000000e+00 : f32
    %116 = vector.broadcast %cst_85 : f32 to vector<16x128xf32>
    %117 = arith.maximumf %115, %116 : vector<16x128xf32>
    %118 = arith.truncf %117 : vector<16x128xf32> to vector<16x128xbf16>
    %c0_86 = arith.constant 0 : index
    %c0_87 = arith.constant 0 : index
    %119 = vector.load %arg8[%c0_86, %c0_87] : memref<128x10xbf16, #tpu.memory_space<vmem>>, vector<128x10xbf16>
    %cst_88 = arith.constant dense<0.000000e+00> : vector<16x10xf32>
    %120 = tpu.matmul %118, %119, %cst_88 {dimension_numbers = #tpu.dot_dimension_numbers<[1], [0], [0], [1], [0, 0, 1, 1], [], []>} : vector<16x128xbf16>, vector<128x10xbf16>, vector<16x10xf32> -> vector<16x10xf32>
    %c0_89 = arith.constant 0 : index
    %c0_90 = arith.constant 0 : index
    %121 = vector.load %arg9[%c0_89, %c0_90] : memref<1x10xf32, #tpu.memory_space<vmem>>, vector<1x10xf32>
    %122 = vector.broadcast %121 : vector<1x10xf32> to vector<16x10xf32>
    %123 = arith.addf %120, %122 : vector<16x10xf32>
    %cst_91 = arith.constant dense<0xFF800000> : vector<16xf32>
    %124 = vector.multi_reduction <maximumf>, %123, %cst_91 [1] : vector<16x10xf32> to vector<16xf32>
    %125 = vector.shape_cast %124 : vector<16xf32> to vector<16x1xf32>
    %126 = vector.broadcast %125 : vector<16x1xf32> to vector<16x10xf32>
    %127 = arith.subf %123, %126 : vector<16x10xf32>
    %128 = math.exp %127 : vector<16x10xf32>
    %cst_92 = arith.constant dense<0.000000e+00> : vector<16xf32>
    %129 = vector.multi_reduction <add>, %128, %cst_92 [1] : vector<16x10xf32> to vector<16xf32>
    %130 = vector.shape_cast %129 : vector<16xf32> to vector<16x1xf32>
    %131 = math.log %130 : vector<16x1xf32>
    %132 = vector.broadcast %131 : vector<16x1xf32> to vector<16x10xf32>
    %133 = arith.subf %127, %132 : vector<16x10xf32>
    %c0_93 = arith.constant 0 : index
    %c0_94 = arith.constant 0 : index
    %134 = vector.load %arg10[%c0_93, %c0_94] : memref<16x10xf32, #tpu.memory_space<vmem>>, vector<16x10xf32>
    tpu.vector_store %arg10[%c0_93, %c0_94], %133 {strides = array<i32>} : memref<16x10xf32, #tpu.memory_space<vmem>>, vector<16x10xf32>,
    return
  }
  func.func @transform_0(%arg0: i32) -> (i32, i32, i32) {
    %c0_i32 = arith.constant 0 : i32
    %c0_i32_0 = arith.constant 0 : i32
    %c0_i32_1 = arith.constant 0 : i32
    return %arg0, %c0_i32, %c0_i32_0 : i32, i32, i32
  }
  func.func @transform_1(%arg0: i32) -> (i32, i32) {
    %c0_i32 = arith.constant 0 : i32
    %c0_i32_0 = arith.constant 0 : i32
    %c0_i32_1 = arith.constant 0 : i32
    return %c0_i32, %c0_i32_0 : i32, i32
  }
  func.func @transform_2(%arg0: i32) -> (i32, i32) {
    %c0_i32 = arith.constant 0 : i32
    %c0_i32_0 = arith.constant 0 : i32
    %c0_i32_1 = arith.constant 0 : i32
    return %c0_i32, %c0_i32_0 : i32, i32
  }
  func.func @transform_3(%arg0: i32) -> (i32, i32, i32) {
    %c0_i32 = arith.constant 0 : i32
    %c0_i32_0 = arith.constant 0 : i32
    %c0_i32_1 = arith.constant 0 : i32
    %c0_i32_2 = arith.constant 0 : i32
    return %c0_i32, %c0_i32_0, %c0_i32_1 : i32, i32, i32
  }
  func.func @transform_4(%arg0: i32) -> (i32, i32) {
    %c0_i32 = arith.constant 0 : i32
    %c0_i32_0 = arith.constant 0 : i32
    %c0_i32_1 = arith.constant 0 : i32
    return %c0_i32, %c0_i32_0 : i32, i32
  }
  func.func @transform_5(%arg0: i32) -> (i32, i32, i32) {
    %c0_i32 = arith.constant 0 : i32
    %c0_i32_0 = arith.constant 0 : i32
    %c0_i32_1 = arith.constant 0 : i32
    %c0_i32_2 = arith.constant 0 : i32
    return %c0_i32, %c0_i32_0, %c0_i32_1 : i32, i32, i32
  }
  func.func @transform_6(%arg0: i32) -> (i32, i32) {
    %c0_i32 = arith.constant 0 : i32
    %c0_i32_0 = arith.constant 0 : i32
    %c0_i32_1 = arith.constant 0 : i32
    return %c0_i32, %c0_i32_0 : i32, i32
  }
  func.func @transform_7(%arg0: i32) -> (i32, i32) {
    %c0_i32 = arith.constant 0 : i32
    %c0_i32_0 = arith.constant 0 : i32
    %c0_i32_1 = arith.constant 0 : i32
    return %c0_i32, %c0_i32_0 : i32, i32
  }
  func.func @transform_8(%arg0: i32) -> (i32, i32) {
    %c0_i32 = arith.constant 0 : i32
    %c0_i32_0 = arith.constant 0 : i32
    %c0_i32_1 = arith.constant 0 : i32
    return %c0_i32, %c0_i32_0 : i32, i32
  }
  func.func @transform_9(%arg0: i32) -> (i32, i32) {
    %c0_i32 = arith.constant 0 : i32
    %c0_i32_0 = arith.constant 0 : i32
    return %arg0, %c0_i32 : i32, i32
  }
}

</mosaic_0001>

<llo_original>
// kernel: net_forward.1
$region0: #{net_forward.1}
  #allocation0 [shape = 'u32[]', space=smem, size = 0x4, offset = 0x4, fixed_abs, tag = 'smem constant byte address 0x4 - core index']
  #allocation1 [shape = 'u32[72,128]{1,0:T(1,128)}', space=vmem, size = 0x9000, scoped, tag = 'internal scratch']
  %s0 = inlined_call_operand.vmem [shape: bf16[4,96,140], index: 0, kind: input, shape index: {}]
  %s1 = inlined_call_operand.vmem [shape: bf16[140,256], index: 1, kind: input, shape index: {}]
  %s2 = inlined_call_operand.vmem [shape: f32[1,128], index: 2, kind: input, shape index: {}]
  %s3 = inlined_call_operand.vmem [shape: bf16[5,128,256], index: 3, kind: input, shape index: {}]
  %s4 = inlined_call_operand.vmem [shape: f32[1,128], index: 4, kind: input, shape index: {}]
  %s5 = inlined_call_operand.vmem [shape: bf16[4,128,128], index: 5, kind: input, shape index: {}]
  %s6 = inlined_call_operand.vmem [shape: f32[1,128], index: 6, kind: input, shape index: {}]
  %s7 = inlined_call_operand.vmem [shape: bf16[128,10], index: 7, kind: input, shape index: {}]
  %s8 = inlined_call_operand.vmem [shape: f32[1,10], index: 8, kind: input, shape index: {}]
  %s9 = inlined_call_operand.vmem [shape: f32[16,10], index: 9, kind: output, shape index: {}]
  %s10 = sld [smem:[#allocation0]]
  $region46: #{net_forward.1} parent=0
    _
  %s12 = ssub.s32 1, %s10
  %s13 = scalar_select 0, %s12, %s10
  // Predicated region
  $region2: #{net_forward.1} parent=0 // pred_check
    _
  $region3: #{net_forward.1} parent=0 // pred_check_branch
    %15 = sbr.rel (0) target = $region5
  $region4: #{net_forward.1} parent=0 // pred_region
    _
  $region5: #{net_forward.1} parent=0 // pred_fallthru
    _
  // Predicated region
  $region6: #{net_forward.1} parent=0 // pred_check
    _
  $region7: #{net_forward.1} parent=0 // pred_check_branch
    %17 = sbr.rel (0) target = $region9
  $region8: #{net_forward.1} parent=0 // pred_region
    _
  $region9: #{net_forward.1} parent=0 // pred_fallthru
    _
  // Predicated region
  $region10: #{net_forward.1} parent=0 // pred_check
    _
  $region11: #{net_forward.1} parent=0 // pred_check_branch
    %19 = sbr.rel (0) target = $region13
  $region12: #{net_forward.1} parent=0 // pred_region
    _
  $region13: #{net_forward.1} parent=0 // pred_fallthru
    _
  // Predicated region
  $region14: #{net_forward.1} parent=0 // pred_check
    _
  $region15: #{net_forward.1} parent=0 // pred_check_branch
    %21 = sbr.rel (0) target = $region17
  $region16: #{net_forward.1} parent=0 // pred_region
    _
  $region17: #{net_forward.1} parent=0 // pred_fallthru
    _
  // Predicated region
  $region18: #{net_forward.1} parent=0 // pred_check
    _
  $region19: #{net_forward.1} parent=0 // pred_check_branch
    %23 = sbr.rel (0) target = $region21
  $region20: #{net_forward.1} parent=0 // pred_region
    _
  $region21: #{net_forward.1} parent=0 // pred_fallthru
    _
  // Predicated region
  $region22: #{net_forward.1} parent=0 // pred_check
    _
  $region23: #{net_forward.1} parent=0 // pred_check_branch
    %25 = sbr.rel (0) target = $region25
  $region24: #{net_forward.1} parent=0 // pred_region
    _
  $region25: #{net_forward.1} parent=0 // pred_fallthru
    _
  // Predicated region
  $region26: #{net_forward.1} parent=0 // pred_check
    _
  $region27: #{net_forward.1} parent=0 // pred_check_branch
    %27 = sbr.rel (0) target = $region29
  $region28: #{net_forward.1} parent=0 // pred_region
    _
  $region29: #{net_forward.1} parent=0 // pred_fallthru
    _
  // Predicated region
  $region30: #{net_forward.1} parent=0 // pred_check
    _
  $region31: #{net_forward.1} parent=0 // pred_check_branch
    %29 = sbr.rel (0) target = $region33
  $region32: #{net_forward.1} parent=0 // pred_region
    _
  $region33: #{net_forward.1} parent=0 // pred_fallthru
    _
  // Predicated region
  $region34: #{net_forward.1} parent=0 // pred_check
    _
  $region35: #{net_forward.1} parent=0 // pred_check_branch
    %31 = sbr.rel (0) target = $region37
  $region36: #{net_forward.1} parent=0 // pred_region
    _
  $region37: #{net_forward.1} parent=0 // pred_fallthru
    _
  %v33 = vld [vmem:[%s0] sm:$0xff]
  %v34 = vld [vmem:[%s0 + $0x8] sm:$0xff]
  %v35 = vld [vmem:[%s0 + $0x10] sm:$0xff]
  %v36 = vld [vmem:[%s0 + $0x18] sm:$0xff]
  %v37 = vld [vmem:[%s0 + $0x20] sm:$0xff]
  %v38 = vld [vmem:[%s0 + $0x28] sm:$0xff]
  %v39 = vld [vmem:[%s0 + $0x30] sm:$0xff]
  %v40 = vld [vmem:[%s0 + $0x38] sm:$0xff]
  %v41 = vld [vmem:[%s0 + $0x40] sm:$0xff]
  %v42 = vld [vmem:[%s0 + $0x48] sm:$0xff]
  %v43 = vld [vmem:[%s0 + $0x50] sm:$0xff]
  %v44 = vld [vmem:[%s0 + $0x58] sm:$0xff]
  %v45 = vld [vmem:[%s1] sm:$0xff]
  %v46 = vld [vmem:[%s1 + $0x8] sm:$0xff]
  %v47 = vld [vmem:[%s1 + $0x10] sm:$0xff]
  %v48 = vld [vmem:[%s1 + $0x18] sm:$0xff]
  %v49 = vld [vmem:[%s1 + $0x20] sm:$0xff]
  %v50 = vld [vmem:[%s1 + $0x28] sm:$0xff]
  %v51 = vld [vmem:[%s1 + $0x30] sm:$0xff]
  %v52 = vld [vmem:[%s1 + $0x38] sm:$0xff]
  %v53 = vld [vmem:[%s1 + $0x40] sm:$0xff]
  %v54 = vld [vmem:[%s1 + $0x48] sm:$0xff]
  %v55 = vld [vmem:[%s1 + $0x50] sm:$0xff]
  %v56 = vld [vmem:[%s1 + $0x58] sm:$0xff]
  %v57 = vld [vmem:[%s1 + $0x60] sm:$0xff]
  %v58 = vld [vmem:[%s1 + $0x68] sm:$0xff]
  %v59 = vld [vmem:[%s1 + $0x70] sm:$0xff]
  %v60 = vld [vmem:[%s1 + $0x78] sm:$0xff]
  %v61 = vld [vmem:[%s1 + $0x80] sm:$0xff]
  %v62 = vld [vmem:[%s1 + $0x88] sm:$0x33]
  %v75 = vunpack.c.l.b16 %v33
  %v76 = vunpack.c.h.b16 %v33
  %v77 = vunpack.c.l.b16 %v34
  %v78 = vunpack.c.h.b16 %v34
  %v79 = vunpack.c.l.b16 %v35
  %v80 = vunpack.c.h.b16 %v35
  %v81 = vunpack.c.l.b16 %v36
  %v82 = vunpack.c.h.b16 %v36
  %v83 = vunpack.c.l.b16 %v37
  %v84 = vunpack.c.h.b16 %v37
  %v85 = vunpack.c.l.b16 %v38
  %v86 = vunpack.c.h.b16 %v38
  %v87 = vunpack.c.l.b16 %v39
  %v88 = vunpack.c.h.b16 %v39
  %v89 = vunpack.c.l.b16 %v40
  %v90 = vunpack.c.h.b16 %v40
  %v91 = vunpack.c.l.b16 %v41
  %v92 = vunpack.c.h.b16 %v41
  %v93 = vunpack.c.l.b16 %v42
  %v94 = vunpack.c.h.b16 %v42
  %v95 = vunpack.c.l.b16 %v43
  %v96 = vunpack.c.h.b16 %v43
  %v97 = vunpack.c.l.b16 %v44
  %v98 = vunpack.c.h.b16 %v44
  %v99 = vpack.c.b16 %v77, %v75
  %v100 = vpack.c.b16 %v78, %v76
  %v101 = vpack.c.b16 %v81, %v79
  %v102 = vpack.c.b16 %v82, %v80
  %v103 = vpack.c.b16 %v85, %v83
  %v104 = vpack.c.b16 %v86, %v84
  %v105 = vpack.c.b16 %v89, %v87
  %v106 = vpack.c.b16 %v90, %v88
  %v107 = vpack.c.b16 %v93, %v91
  %v108 = vpack.c.b16 %v94, %v92
  %v109 = vpack.c.b16 %v97, %v95
  %v110 = vpack.c.b16 %v98, %v96
  %v135 = vunpack.c.l.b16 %v45
  %v136 = vunpack.c.h.b16 %v45
  %v137 = vunpack.c.l.b16 %v46
  %v138 = vunpack.c.h.b16 %v46
  %v139 = vunpack.c.l.b16 %v47
  %v140 = vunpack.c.h.b16 %v47
  %v141 = vunpack.c.l.b16 %v48
  %v142 = vunpack.c.h.b16 %v48
  %v143 = vunpack.c.l.b16 %v49
  %v144 = vunpack.c.h.b16 %v49
  %v145 = vunpack.c.l.b16 %v50
  %v146 = vunpack.c.h.b16 %v50
  %v147 = vunpack.c.l.b16 %v51
  %v148 = vunpack.c.h.b16 %v51
  %v149 = vunpack.c.l.b16 %v52
  %v150 = vunpack.c.h.b16 %v52
  %v151 = vunpack.c.l.b16 %v53
  %v152 = vunpack.c.h.b16 %v53
  %v153 = vunpack.c.l.b16 %v54
  %v154 = vunpack.c.h.b16 %v54
  %v155 = vunpack.c.l.b16 %v55
  %v156 = vunpack.c.h.b16 %v55
  %v157 = vunpack.c.l.b16 %v56
  %v158 = vunpack.c.h.b16 %v56
  %v159 = vunpack.c.l.b16 %v57
  %v160 = vunpack.c.h.b16 %v57
  %v161 = vunpack.c.l.b16 %v58
  %v162 = vunpack.c.h.b16 %v58
  %v163 = vunpack.c.l.b16 %v59
  %v164 = vunpack.c.h.b16 %v59
  %v165 = vunpack.c.l.b16 %v60
  %v166 = vunpack.c.h.b16 %v60
  %v167 = vunpack.c.l.b16 %v61
  %v168 = vunpack.c.h.b16 %v61
  %v169 = vunpack.c.l.b16 %v62
  %v170 = vunpack.c.h.b16 %v62
  %v171 = vpack.c.b16 %v137, %v135
  %v172 = vpack.c.b16 %v138, %v136
  %v173 = vpack.c.b16 %v141, %v139
  %v174 = vpack.c.b16 %v142, %v140
  %v175 = vpack.c.b16 %v145, %v143
  %v176 = vpack.c.b16 %v146, %v144
  %v177 = vpack.c.b16 %v149, %v147
  %v178 = vpack.c.b16 %v150, %v148
  %v179 = vpack.c.b16 %v153, %v151
  %v180 = vpack.c.b16 %v154, %v152
  %v181 = vpack.c.b16 %v157, %v155
  %v182 = vpack.c.b16 %v158, %v156
  %v183 = vpack.c.b16 %v161, %v159
  %v184 = vpack.c.b16 %v162, %v160
  %v185 = vpack.c.b16 %v165, %v163
  %v186 = vpack.c.b16 %v166, %v164
  %v187 = vpack.c.b16 %v169, %v167
  %v188 = vpack.c.b16 %v170, %v168
  %vm205 = vcmask 97280
  %v207 = vsel %vm205, %v100, 0
  %v210 = vsel %vm205, %v102, 0
  %v213 = vsel %vm205, %v104, 0
  %v216 = vsel %vm205, %v106, 0
  %v219 = vsel %vm205, %v108, 0
  %v222 = vsel %vm205, %v110, 0
  %vm224 = vcmask 1045504
  %v226 = vsel %vm224, %v187, 0
  %v229 = vsel %vm224, %v188, 0
  %231 = vmatpush.bf16.msra.mxu0 %v185
  %232 = vmatpush.bf16.msra.mxu0 %v183
  %233 = vmatpush.bf16.msra.mxu0 %v181
  %234 = vmatpush.bf16.msra.mxu0 %v179
  %235 = vmatpush.bf16.msra.mxu0 %v177
  %236 = vmatpush.bf16.msra.mxu0 %v175
  %237 = vmatpush.bf16.msra.mxu0 %v173
  %238 = vmatpush.bf16.msra.mxu0 %v171
  %239 = vmatmul.bf16.gmra.mxu0 %v99
  %v240 = vpop.f32.mrf.mxu0
  %v241 = vadd.f32 0.0, %v240
  %v242 = vpop.f32.mrf.mxu0
  %v243 = vadd.f32 0.0, %v242
  %244 = vmatmul.bf16.gmra.mxu0 %v101
  %v245 = vpop.f32.mrf.mxu0
  %v246 = vadd.f32 0.0, %v245
  %v247 = vpop.f32.mrf.mxu0
  %v248 = vadd.f32 0.0, %v247
  %249 = vmatmul.bf16.gmra.mxu0 %v103
  %v250 = vpop.f32.mrf.mxu0
  %v251 = vadd.f32 0.0, %v250
  %v252 = vpop.f32.mrf.mxu0
  %v253 = vadd.f32 0.0, %v252
  %254 = vmatmul.bf16.gmra.mxu0 %v105
  %v255 = vpop.f32.mrf.mxu0
  %v256 = vadd.f32 0.0, %v255
  %v257 = vpop.f32.mrf.mxu0
  %v258 = vadd.f32 0.0, %v257
  %259 = vmatmul.bf16.gmra.mxu0 %v107
  %v260 = vpop.f32.mrf.mxu0
  %v261 = vadd.f32 0.0, %v260
  %v262 = vpop.f32.mrf.mxu0
  %v263 = vadd.f32 0.0, %v262
  %264 = vmatmul.bf16.gmra.mxu0 %v109
  %v265 = vpop.f32.mrf.mxu0
  %v266 = vadd.f32 0.0, %v265
  %v267 = vpop.f32.mrf.mxu0
  %v268 = vadd.f32 0.0, %v267
  %269 = vdwg.mxu0
  %270 = vmatpush.bf16.msra.mxu0 0
  %271 = vmatpush.bf16.msra.mxu0 0
  %272 = vmatpush.bf16.msra.mxu0 0
  %273 = vmatpush.bf16.msra.mxu0 0
  %274 = vmatpush.bf16.msra.mxu0 0
  %275 = vmatpush.bf16.msra.mxu0 0
  %276 = vmatpush.bf16.msra.mxu0 0
  %277 = vmatpush.bf16.msra.mxu0 %v226
  %278 = vmatmul.bf16.gmra.mxu0 %v207
  %v279 = vpop.f32.mrf.mxu0
  %v280 = vadd.f32 %v241, %v279
  %v281 = vpop.f32.mrf.mxu0
  %v282 = vadd.f32 %v243, %v281
  %283 = vmatmul.bf16.gmra.mxu0 %v210
  %v284 = vpop.f32.mrf.mxu0
  %v285 = vadd.f32 %v246, %v284
  %v286 = vpop.f32.mrf.mxu0
  %v287 = vadd.f32 %v248, %v286
  %288 = vmatmul.bf16.gmra.mxu0 %v213
  %v289 = vpop.f32.mrf.mxu0
  %v290 = vadd.f32 %v251, %v289
  %v291 = vpop.f32.mrf.mxu0
  %v292 = vadd.f32 %v253, %v291
  %293 = vmatmul.bf16.gmra.mxu0 %v216
  %v294 = vpop.f32.mrf.mxu0
  %v295 = vadd.f32 %v256, %v294
  %v296 = vpop.f32.mrf.mxu0
  %v297 = vadd.f32 %v258, %v296
  %298 = vmatmul.bf16.gmra.mxu0 %v219
  %v299 = vpop.f32.mrf.mxu0
  %v300 = vadd.f32 %v261, %v299
  %v301 = vpop.f32.mrf.mxu0
  %v302 = vadd.f32 %v263, %v301
  %303 = vmatmul.bf16.gmra.mxu0 %v222
  %v304 = vpop.f32.mrf.mxu0
  %v305 = vadd.f32 %v266, %v304
  %v306 = vpop.f32.mrf.mxu0
  %v307 = vadd.f32 %v268, %v306
  %308 = vdwg.mxu0
  %309 = vmatpush.bf16.msra.mxu0 %v186
  %310 = vmatpush.bf16.msra.mxu0 %v184
  %311 = vmatpush.bf16.msra.mxu0 %v182
  %312 = vmatpush.bf16.msra.mxu0 %v180
  %313 = vmatpush.bf16.msra.mxu0 %v178
  %314 = vmatpush.bf16.msra.mxu0 %v176
  %315 = vmatpush.bf16.msra.mxu0 %v174
  %316 = vmatpush.bf16.msra.mxu0 %v172
  %317 = vmatmul.bf16.gmra.mxu0 %v99
  %v318 = vpop.f32.mrf.mxu0
  %v319 = vadd.f32 0.0, %v318
  %v320 = vpop.f32.mrf.mxu0
  %v321 = vadd.f32 0.0, %v320
  %322 = vmatmul.bf16.gmra.mxu0 %v101
  %v323 = vpop.f32.mrf.mxu0
  %v324 = vadd.f32 0.0, %v323
  %v325 = vpop.f32.mrf.mxu0
  %v326 = vadd.f32 0.0, %v325
  %327 = vmatmul.bf16.gmra.mxu0 %v103
  %v328 = vpop.f32.mrf.mxu0
  %v329 = vadd.f32 0.0, %v328
  %v330 = vpop.f32.mrf.mxu0
  %v331 = vadd.f32 0.0, %v330
  %332 = vmatmul.bf16.gmra.mxu0 %v105
  %v333 = vpop.f32.mrf.mxu0
  %v334 = vadd.f32 0.0, %v333
  %v335 = vpop.f32.mrf.mxu0
  %v336 = vadd.f32 0.0, %v335
  %337 = vmatmul.bf16.gmra.mxu0 %v107
  %v338 = vpop.f32.mrf.mxu0
  %v339 = vadd.f32 0.0, %v338
  %v340 = vpop.f32.mrf.mxu0
  %v341 = vadd.f32 0.0, %v340
  %342 = vmatmul.bf16.gmra.mxu0 %v109
  %v343 = vpop.f32.mrf.mxu0
  %v344 = vadd.f32 0.0, %v343
  %v345 = vpop.f32.mrf.mxu0
  %v346 = vadd.f32 0.0, %v345
  %347 = vdwg.mxu0
  %348 = vmatpush.bf16.msra.mxu0 0
  %349 = vmatpush.bf16.msra.mxu0 0
  %350 = vmatpush.bf16.msra.mxu0 0
  %351 = vmatpush.bf16.msra.mxu0 0
  %352 = vmatpush.bf16.msra.mxu0 0
  %353 = vmatpush.bf16.msra.mxu0 0
  %354 = vmatpush.bf16.msra.mxu0 0
  %355 = vmatpush.bf16.msra.mxu0 %v229
  %356 = vmatmul.bf16.gmra.mxu0 %v207
  %v357 = vpop.f32.mrf.mxu0
  %v358 = vadd.f32 %v319, %v357
  %v359 = vpop.f32.mrf.mxu0
  %v360 = vadd.f32 %v321, %v359
  %361 = vmatmul.bf16.gmra.mxu0 %v210
  %v362 = vpop.f32.mrf.mxu0
  %v363 = vadd.f32 %v324, %v362
  %v364 = vpop.f32.mrf.mxu0
  %v365 = vadd.f32 %v326, %v364
  %366 = vmatmul.bf16.gmra.mxu0 %v213
  %v367 = vpop.f32.mrf.mxu0
  %v368 = vadd.f32 %v329, %v367
  %v369 = vpop.f32.mrf.mxu0
  %v370 = vadd.f32 %v331, %v369
  %371 = vmatmul.bf16.gmra.mxu0 %v216
  %v372 = vpop.f32.mrf.mxu0
  %v373 = vadd.f32 %v334, %v372
  %v374 = vpop.f32.mrf.mxu0
  %v375 = vadd.f32 %v336, %v374
  %376 = vmatmul.bf16.gmra.mxu0 %v219
  %v377 = vpop.f32.mrf.mxu0
  %v378 = vadd.f32 %v339, %v377
  %v379 = vpop.f32.mrf.mxu0
  %v380 = vadd.f32 %v341, %v379
  %381 = vmatmul.bf16.gmra.mxu0 %v222
  %v382 = vpop.f32.mrf.mxu0
  %v383 = vadd.f32 %v344, %v382
  %v384 = vpop.f32.mrf.mxu0
  %v385 = vadd.f32 %v346, %v384
  %386 = vdwg.mxu0
  %s387 = scalar_lea.vmem %s0, 96
  %v388 = vld [vmem:[%s387] sm:$0xff]
  %v389 = vld [vmem:[%s387 + $0x8] sm:$0xff]
  %v390 = vld [vmem:[%s387 + $0x10] sm:$0xff]
  %v391 = vld [vmem:[%s387 + $0x18] sm:$0xff]
  %v392 = vld [vmem:[%s387 + $0x20] sm:$0xff]
  %v393 = vld [vmem:[%s387 + $0x28] sm:$0xff]
  %v394 = vld [vmem:[%s387 + $0x30] sm:$0xff]
  %v395 = vld [vmem:[%s387 + $0x38] sm:$0xff]
  %v396 = vld [vmem:[%s387 + $0x40] sm:$0xff]
  %v397 = vld [vmem:[%s387 + $0x48] sm:$0xff]
  %v398 = vld [vmem:[%s387 + $0x50] sm:$0xff]
  %v399 = vld [vmem:[%s387 + $0x58] sm:$0xff]
  %v412 = vunpack.c.l.b16 %v388
  %v413 = vunpack.c.h.b16 %v388
  %v414 = vunpack.c.l.b16 %v389
  %v415 = vunpack.c.h.b16 %v389
  %v416 = vunpack.c.l.b16 %v390
  %v417 = vunpack.c.h.b16 %v390
  %v418 = vunpack.c.l.b16 %v391
  %v419 = vunpack.c.h.b16 %v391
  %v420 = vunpack.c.l.b16 %v392
  %v421 = vunpack.c.h.b16 %v392
  %v422 = vunpack.c.l.b16 %v393
  %v423 = vunpack.c.h.b16 %v393
  %v424 = vunpack.c.l.b16 %v394
  %v425 = vunpack.c.h.b16 %v394
  %v426 = vunpack.c.l.b16 %v395
  %v427 = vunpack.c.h.b16 %v395
  %v428 = vunpack.c.l.b16 %v396
  %v429 = vunpack.c.h.b16 %v396
  %v430 = vunpack.c.l.b16 %v397
  %v431 = vunpack.c.h.b16 %v397
  %v432 = vunpack.c.l.b16 %v398
  %v433 = vunpack.c.h.b16 %v398
  %v434 = vunpack.c.l.b16 %v399
  %v435 = vunpack.c.h.b16 %v399
  %v436 = vpack.c.b16 %v414, %v412
  %v437 = vpack.c.b16 %v415, %v413
  %v438 = vpack.c.b16 %v418, %v416
  %v439 = vpack.c.b16 %v419, %v417
  %v440 = vpack.c.b16 %v422, %v420
  %v441 = vpack.c.b16 %v423, %v421
  %v442 = vpack.c.b16 %v426, %v424
  %v443 = vpack.c.b16 %v427, %v425
  %v444 = vpack.c.b16 %v430, %v428
  %v445 = vpack.c.b16 %v431, %v429
  %v446 = vpack.c.b16 %v434, %v432
  %v447 = vpack.c.b16 %v435, %v433
  %v455 = vsel %vm205, %v437, 0
  %v458 = vsel %vm205, %v439, 0
  %v461 = vsel %vm205, %v441, 0
  %v464 = vsel %vm205, %v443, 0
  %v467 = vsel %vm205, %v445, 0
  %v470 = vsel %vm205, %v447, 0
  %472 = vmatpush.bf16.msra.mxu0 %v185
  %473 = vmatpush.bf16.msra.mxu0 %v183
  %474 = vmatpush.bf16.msra.mxu0 %v181
  %475 = vmatpush.bf16.msra.mxu0 %v179
  %476 = vmatpush.bf16.msra.mxu0 %v177
  %477 = vmatpush.bf16.msra.mxu0 %v175
  %478 = vmatpush.bf16.msra.mxu0 %v173
  %479 = vmatpush.bf16.msra.mxu0 %v171
  %480 = vmatmul.bf16.gmra.mxu0 %v436
  %v481 = vpop.f32.mrf.mxu0
  %v482 = vadd.f32 0.0, %v481
  %v483 = vpop.f32.mrf.mxu0
  %v484 = vadd.f32 0.0, %v483
  %485 = vmatmul.bf16.gmra.mxu0 %v438
  %v486 = vpop.f32.mrf.mxu0
  %v487 = vadd.f32 0.0, %v486
  %v488 = vpop.f32.mrf.mxu0
  %v489 = vadd.f32 0.0, %v488
  %490 = vmatmul.bf16.gmra.mxu0 %v440
  %v491 = vpop.f32.mrf.mxu0
  %v492 = vadd.f32 0.0, %v491
  %v493 = vpop.f32.mrf.mxu0
  %v494 = vadd.f32 0.0, %v493
  %495 = vmatmul.bf16.gmra.mxu0 %v442
  %v496 = vpop.f32.mrf.mxu0
  %v497 = vadd.f32 0.0, %v496
  %v498 = vpop.f32.mrf.mxu0
  %v499 = vadd.f32 0.0, %v498
  %500 = vmatmul.bf16.gmra.mxu0 %v444
  %v501 = vpop.f32.mrf.mxu0
  %v502 = vadd.f32 0.0, %v501
  %v503 = vpop.f32.mrf.mxu0
  %v504 = vadd.f32 0.0, %v503
  %505 = vmatmul.bf16.gmra.mxu0 %v446
  %v506 = vpop.f32.mrf.mxu0
  %v507 = vadd.f32 0.0, %v506
  %v508 = vpop.f32.mrf.mxu0
  %v509 = vadd.f32 0.0, %v508
  %510 = vdwg.mxu0
  %511 = vmatpush.bf16.msra.mxu0 0
  %512 = vmatpush.bf16.msra.mxu0 0
  %513 = vmatpush.bf16.msra.mxu0 0
  %514 = vmatpush.bf16.msra.mxu0 0
  %515 = vmatpush.bf16.msra.mxu0 0
  %516 = vmatpush.bf16.msra.mxu0 0
  %517 = vmatpush.bf16.msra.mxu0 0
  %518 = vmatpush.bf16.msra.mxu0 %v226
  %519 = vmatmul.bf16.gmra.mxu0 %v455
  %v520 = vpop.f32.mrf.mxu0
  %v521 = vadd.f32 %v482, %v520
  %v522 = vpop.f32.mrf.mxu0
  %v523 = vadd.f32 %v484, %v522
  %524 = vmatmul.bf16.gmra.mxu0 %v458
  %v525 = vpop.f32.mrf.mxu0
  %v526 = vadd.f32 %v487, %v525
  %v527 = vpop.f32.mrf.mxu0
  %v528 = vadd.f32 %v489, %v527
  %529 = vmatmul.bf16.gmra.mxu0 %v461
  %v530 = vpop.f32.mrf.mxu0
  %v531 = vadd.f32 %v492, %v530
  %v532 = vpop.f32.mrf.mxu0
  %v533 = vadd.f32 %v494, %v532
  %534 = vmatmul.bf16.gmra.mxu0 %v464
  %v535 = vpop.f32.mrf.mxu0
  %v536 = vadd.f32 %v497, %v535
  %v537 = vpop.f32.mrf.mxu0
  %v538 = vadd.f32 %v499, %v537
  %539 = vmatmul.bf16.gmra.mxu0 %v467
  %v540 = vpop.f32.mrf.mxu0
  %v541 = vadd.f32 %v502, %v540
  %v542 = vpop.f32.mrf.mxu0
  %v543 = vadd.f32 %v504, %v542
  %544 = vmatmul.bf16.gmra.mxu0 %v470
  %v545 = vpop.f32.mrf.mxu0
  %v546 = vadd.f32 %v507, %v545
  %v547 = vpop.f32.mrf.mxu0
  %v548 = vadd.f32 %v509, %v547
  %549 = vdwg.mxu0
  %550 = vmatpush.bf16.msra.mxu0 %v186
  %551 = vmatpush.bf16.msra.mxu0 %v184
  %552 = vmatpush.bf16.msra.mxu0 %v182
  %553 = vmatpush.bf16.msra.mxu0 %v180
  %554 = vmatpush.bf16.msra.mxu0 %v178
  %555 = vmatpush.bf16.msra.mxu0 %v176
  %556 = vmatpush.bf16.msra.mxu0 %v174
  %557 = vmatpush.bf16.msra.mxu0 %v172
  %558 = vmatmul.bf16.gmra.mxu0 %v436
  %v559 = vpop.f32.mrf.mxu0
  %v560 = vadd.f32 0.0, %v559
  %v561 = vpop.f32.mrf.mxu0
  %v562 = vadd.f32 0.0, %v561
  %563 = vmatmul.bf16.gmra.mxu0 %v438
  %v564 = vpop.f32.mrf.mxu0
  %v565 = vadd.f32 0.0, %v564
  %v566 = vpop.f32.mrf.mxu0
  %v567 = vadd.f32 0.0, %v566
  %568 = vmatmul.bf16.gmra.mxu0 %v440
  %v569 = vpop.f32.mrf.mxu0
  %v570 = vadd.f32 0.0, %v569
  %v571 = vpop.f32.mrf.mxu0
  %v572 = vadd.f32 0.0, %v571
  %573 = vmatmul.bf16.gmra.mxu0 %v442
  %v574 = vpop.f32.mrf.mxu0
  %v575 = vadd.f32 0.0, %v574
  %v576 = vpop.f32.mrf.mxu0
  %v577 = vadd.f32 0.0, %v576
  %578 = vmatmul.bf16.gmra.mxu0 %v444
  %v579 = vpop.f32.mrf.mxu0
  %v580 = vadd.f32 0.0, %v579
  %v581 = vpop.f32.mrf.mxu0
  %v582 = vadd.f32 0.0, %v581
  %583 = vmatmul.bf16.gmra.mxu0 %v446
  %v584 = vpop.f32.mrf.mxu0
  %v585 = vadd.f32 0.0, %v584
  %v586 = vpop.f32.mrf.mxu0
  %v587 = vadd.f32 0.0, %v586
  %588 = vdwg.mxu0
  %589 = vmatpush.bf16.msra.mxu0 0
  %590 = vmatpush.bf16.msra.mxu0 0
  %591 = vmatpush.bf16.msra.mxu0 0
  %592 = vmatpush.bf16.msra.mxu0 0
  %593 = vmatpush.bf16.msra.mxu0 0
  %594 = vmatpush.bf16.msra.mxu0 0
  %595 = vmatpush.bf16.msra.mxu0 0
  %596 = vmatpush.bf16.msra.mxu0 %v229
  %597 = vmatmul.bf16.gmra.mxu0 %v455
  %v598 = vpop.f32.mrf.mxu0
  %v599 = vadd.f32 %v560, %v598
  %v600 = vpop.f32.mrf.mxu0
  %v601 = vadd.f32 %v562, %v600
  %602 = vmatmul.bf16.gmra.mxu0 %v458
  %v603 = vpop.f32.mrf.mxu0
  %v604 = vadd.f32 %v565, %v603
  %v605 = vpop.f32.mrf.mxu0
  %v606 = vadd.f32 %v567, %v605
  %607 = vmatmul.bf16.gmra.mxu0 %v461
  %v608 = vpop.f32.mrf.mxu0
  %v609 = vadd.f32 %v570, %v608
  %v610 = vpop.f32.mrf.mxu0
  %v611 = vadd.f32 %v572, %v610
  %612 = vmatmul.bf16.gmra.mxu0 %v464
  %v613 = vpop.f32.mrf.mxu0
  %v614 = vadd.f32 %v575, %v613
  %v615 = vpop.f32.mrf.mxu0
  %v616 = vadd.f32 %v577, %v615
  %617 = vmatmul.bf16.gmra.mxu0 %v467
  %v618 = vpop.f32.mrf.mxu0
  %v619 = vadd.f32 %v580, %v618
  %v620 = vpop.f32.mrf.mxu0
  %v621 = vadd.f32 %v582, %v620
  %622 = vmatmul.bf16.gmra.mxu0 %v470
  %v623 = vpop.f32.mrf.mxu0
  %v624 = vadd.f32 %v585, %v623
  %v625 = vpop.f32.mrf.mxu0
  %v626 = vadd.f32 %v587, %v625
  %627 = vdwg.mxu0
  %v628 = vmax.f32 %v280, %v521
  %v629 = vmax.f32 %v358, %v599
  %v630 = vmax.f32 %v282, %v523
  %v631 = vmax.f32 %v360, %v601
  %v632 = vmax.f32 %v285, %v526
  %v633 = vmax.f32 %v363, %v604
  %v634 = vmax.f32 %v287, %v528
  %v635 = vmax.f32 %v365, %v606
  %v636 = vmax.f32 %v290, %v531
  %v637 = vmax.f32 %v368, %v609
  %v638 = vmax.f32 %v292, %v533
  %v639 = vmax.f32 %v370, %v611
  %v640 = vmax.f32 %v295, %v536
  %v641 = vmax.f32 %v373, %v614
  %v642 = vmax.f32 %v297, %v538
  %v643 = vmax.f32 %v375, %v616
  %v644 = vmax.f32 %v300, %v541
  %v645 = vmax.f32 %v378, %v619
  %v646 = vmax.f32 %v302, %v543
  %v647 = vmax.f32 %v380, %v621
  %v648 = vmax.f32 %v305, %v546
  %v649 = vmax.f32 %v383, %v624
  %v650 = vmax.f32 %v307, %v548
  %v651 = vmax.f32 %v385, %v626
  %v652 = vmax.f32 %v628, %v629
  %v653 = vmax.f32 %v630, %v631
  %v654 = vmax.f32 %v632, %v633
  %v655 = vmax.f32 %v634, %v635
  %v656 = vmax.f32 %v636, %v637
  %v657 = vmax.f32 %v638, %v639
  %v658 = vmax.f32 %v640, %v641
  %v659 = vmax.f32 %v642, %v643
  %v660 = vmax.f32 %v644, %v645
  %v661 = vmax.f32 %v646, %v647
  %v662 = vmax.f32 %v648, %v649
  %v663 = vmax.f32 %v650, %v651
  %v664 = vld [vmem:[%s2] sm:$0x1]
  %v666 = vperm.slane %v664, 0
  %v668 = vadd.f32 %v652, %v666
  %v669 = vadd.f32 %v653, %v666
  %v670 = vadd.f32 %v654, %v666
  %v671 = vadd.f32 %v655, %v666
  %v672 = vadd.f32 %v656, %v666
  %v673 = vadd.f32 %v657, %v666
  %v674 = vadd.f32 %v658, %v666
  %v675 = vadd.f32 %v659, %v666
  %v676 = vadd.f32 %v660, %v666
  %v677 = vadd.f32 %v661, %v666
  %v678 = vadd.f32 %v662, %v666
  %v679 = vadd.f32 %v663, %v666
  %v680 = vmax.f32 %v668, 0.0
  %v681 = vmax.f32 %v669, 0.0
  %v682 = vmax.f32 %v670, 0.0
  %v683 = vmax.f32 %v671, 0.0
  %v684 = vmax.f32 %v672, 0.0
  %v685 = vmax.f32 %v673, 0.0
  %v686 = vmax.f32 %v674, 0.0
  %v687 = vmax.f32 %v675, 0.0
  %v688 = vmax.f32 %v676, 0.0
  %v689 = vmax.f32 %v677, 0.0
  %v690 = vmax.f32 %v678, 0.0
  %v691 = vmax.f32 %v679, 0.0
  %v692 = vpack.c.bf16 %v680, %v680
  %v693 = vpack.c.bf16 %v681, %v681
  %v694 = vpack.c.bf16 %v682, %v682
  %v695 = vpack.c.bf16 %v683, %v683
  %v696 = vpack.c.bf16 %v684, %v684
  %v697 = vpack.c.bf16 %v685, %v685
  %v698 = vpack.c.bf16 %v686, %v686
  %v699 = vpack.c.bf16 %v687, %v687
  %v700 = vpack.c.bf16 %v688, %v688
  %v701 = vpack.c.bf16 %v689, %v689
  %v702 = vpack.c.bf16 %v690, %v690
  %v703 = vpack.c.bf16 %v691, %v691
  %s704 = scalar_lea.vmem %s0, 192
  %v705 = vld [vmem:[%s704] sm:$0xff]
  %v706 = vld [vmem:[%s704 + $0x8] sm:$0xff]
  %v707 = vld [vmem:[%s704 + $0x10] sm:$0xff]
  %v708 = vld [vmem:[%s704 + $0x18] sm:$0xff]
  %v709 = vld [vmem:[%s704 + $0x20] sm:$0xff]
  %v710 = vld [vmem:[%s704 + $0x28] sm:$0xff]
  %v711 = vld [vmem:[%s704 + $0x30] sm:$0xff]
  %v712 = vld [vmem:[%s704 + $0x38] sm:$0xff]
  %v713 = vld [vmem:[%s704 + $0x40] sm:$0xff]
  %v714 = vld [vmem:[%s704 + $0x48] sm:$0xff]
  %v715 = vld [vmem:[%s704 + $0x50] sm:$0xff]
  %v716 = vld [vmem:[%s704 + $0x58] sm:$0xff]
  %v729 = vunpack.c.l.b16 %v705
  %v730 = vunpack.c.h.b16 %v705
  %v731 = vunpack.c.l.b16 %v706
  %v732 = vunpack.c.h.b16 %v706
  %v733 = vunpack.c.l.b16 %v707
  %v734 = vunpack.c.h.b16 %v707
  %v735 = vunpack.c.l.b16 %v708
  %v736 = vunpack.c.h.b16 %v708
  %v737 = vunpack.c.l.b16 %v709
  %v738 = vunpack.c.h.b16 %v709
  %v739 = vunpack.c.l.b16 %v710
  %v740 = vunpack.c.h.b16 %v710
  %v741 = vunpack.c.l.b16 %v711
  %v742 = vunpack.c.h.b16 %v711
  %v743 = vunpack.c.l.b16 %v712
  %v744 = vunpack.c.h.b16 %v712
  %v745 = vunpack.c.l.b16 %v713
  %v746 = vunpack.c.h.b16 %v713
  %v747 = vunpack.c.l.b16 %v714
  %v748 = vunpack.c.h.b16 %v714
  %v749 = vunpack.c.l.b16 %v715
  %v750 = vunpack.c.h.b16 %v715
  %v751 = vunpack.c.l.b16 %v716
  %v752 = vunpack.c.h.b16 %v716
  %v753 = vpack.c.b16 %v731, %v729
  %v754 = vpack.c.b16 %v732, %v730
  %v755 = vpack.c.b16 %v735, %v733
  %v756 = vpack.c.b16 %v736, %v734
  %v757 = vpack.c.b16 %v739, %v737
  %v758 = vpack.c.b16 %v740, %v738
  %v759 = vpack.c.b16 %v743, %v741
  %v760 = vpack.c.b16 %v744, %v742
  %v761 = vpack.c.b16 %v747, %v745
  %v762 = vpack.c.b16 %v748, %v746
  %v763 = vpack.c.b16 %v751, %v749
  %v764 = vpack.c.b16 %v752, %v750
  %v772 = vsel %vm205, %v754, 0
  %v775 = vsel %vm205, %v756, 0
  %v778 = vsel %vm205, %v758, 0
  %v781 = vsel %vm205, %v760, 0
  %v784 = vsel %vm205, %v762, 0
  %v787 = vsel %vm205, %v764, 0
  %789 = vmatpush.bf16.msra.mxu0 %v185
  %790 = vmatpush.bf16.msra.mxu0 %v183
  %791 = vmatpush.bf16.msra.mxu0 %v181
  %792 = vmatpush.bf16.msra.mxu0 %v179
  %793 = vmatpush.bf16.msra.mxu0 %v177
  %794 = vmatpush.bf16.msra.mxu0 %v175
  %795 = vmatpush.bf16.msra.mxu0 %v173
  %796 = vmatpush.bf16.msra.mxu0 %v171
  %797 = vmatmul.bf16.gmra.mxu0 %v753
  %v798 = vpop.f32.mrf.mxu0
  %v799 = vadd.f32 0.0, %v798
  %v800 = vpop.f32.mrf.mxu0
  %v801 = vadd.f32 0.0, %v800
  %802 = vmatmul.bf16.gmra.mxu0 %v755
  %v803 = vpop.f32.mrf.mxu0
  %v804 = vadd.f32 0.0, %v803
  %v805 = vpop.f32.mrf.mxu0
  %v806 = vadd.f32 0.0, %v805
  %807 = vmatmul.bf16.gmra.mxu0 %v757
  %v808 = vpop.f32.mrf.mxu0
  %v809 = vadd.f32 0.0, %v808
  %v810 = vpop.f32.mrf.mxu0
  %v811 = vadd.f32 0.0, %v810
  %812 = vmatmul.bf16.gmra.mxu0 %v759
  %v813 = vpop.f32.mrf.mxu0
  %v814 = vadd.f32 0.0, %v813
  %v815 = vpop.f32.mrf.mxu0
  %v816 = vadd.f32 0.0, %v815
  %817 = vmatmul.bf16.gmra.mxu0 %v761
  %v818 = vpop.f32.mrf.mxu0
  %v819 = vadd.f32 0.0, %v818
  %v820 = vpop.f32.mrf.mxu0
  %v821 = vadd.f32 0.0, %v820
  %822 = vmatmul.bf16.gmra.mxu0 %v763
  %v823 = vpop.f32.mrf.mxu0
  %v824 = vadd.f32 0.0, %v823
  %v825 = vpop.f32.mrf.mxu0
  %v826 = vadd.f32 0.0, %v825
  %827 = vdwg.mxu0
  %828 = vmatpush.bf16.msra.mxu0 0
  %829 = vmatpush.bf16.msra.mxu0 0
  %830 = vmatpush.bf16.msra.mxu0 0
  %831 = vmatpush.bf16.msra.mxu0 0
  %832 = vmatpush.bf16.msra.mxu0 0
  %833 = vmatpush.bf16.msra.mxu0 0
  %834 = vmatpush.bf16.msra.mxu0 0
  %835 = vmatpush.bf16.msra.mxu0 %v226
  %836 = vmatmul.bf16.gmra.mxu0 %v772
  %v837 = vpop.f32.mrf.mxu0
  %v838 = vadd.f32 %v799, %v837
  %v839 = vpop.f32.mrf.mxu0
  %v840 = vadd.f32 %v801, %v839
  %841 = vmatmul.bf16.gmra.mxu0 %v775
  %v842 = vpop.f32.mrf.mxu0
  %v843 = vadd.f32 %v804, %v842
  %v844 = vpop.f32.mrf.mxu0
  %v845 = vadd.f32 %v806, %v844
  %846 = vmatmul.bf16.gmra.mxu0 %v778
  %v847 = vpop.f32.mrf.mxu0
  %v848 = vadd.f32 %v809, %v847
  %v849 = vpop.f32.mrf.mxu0
  %v850 = vadd.f32 %v811, %v849
  %851 = vmatmul.bf16.gmra.mxu0 %v781
  %v852 = vpop.f32.mrf.mxu0
  %v853 = vadd.f32 %v814, %v852
  %v854 = vpop.f32.mrf.mxu0
  %v855 = vadd.f32 %v816, %v854
  %856 = vmatmul.bf16.gmra.mxu0 %v784
  %v857 = vpop.f32.mrf.mxu0
  %v858 = vadd.f32 %v819, %v857
  %v859 = vpop.f32.mrf.mxu0
  %v860 = vadd.f32 %v821, %v859
  %861 = vmatmul.bf16.gmra.mxu0 %v787
  %v862 = vpop.f32.mrf.mxu0
  %v863 = vadd.f32 %v824, %v862
  %v864 = vpop.f32.mrf.mxu0
  %v865 = vadd.f32 %v826, %v864
  %866 = vdwg.mxu0
  %867 = vmatpush.bf16.msra.mxu0 %v186
  %868 = vmatpush.bf16.msra.mxu0 %v184
  %869 = vmatpush.bf16.msra.mxu0 %v182
  %870 = vmatpush.bf16.msra.mxu0 %v180
  %871 = vmatpush.bf16.msra.mxu0 %v178
  %872 = vmatpush.bf16.msra.mxu0 %v176
  %873 = vmatpush.bf16.msra.mxu0 %v174
  %874 = vmatpush.bf16.msra.mxu0 %v172
  %875 = vmatmul.bf16.gmra.mxu0 %v753
  %v876 = vpop.f32.mrf.mxu0
  %v877 = vadd.f32 0.0, %v876
  %v878 = vpop.f32.mrf.mxu0
  %v879 = vadd.f32 0.0, %v878
  %880 = vmatmul.bf16.gmra.mxu0 %v755
  %v881 = vpop.f32.mrf.mxu0
  %v882 = vadd.f32 0.0, %v881
  %v883 = vpop.f32.mrf.mxu0
  %v884 = vadd.f32 0.0, %v883
  %885 = vmatmul.bf16.gmra.mxu0 %v757
  %v886 = vpop.f32.mrf.mxu0
  %v887 = vadd.f32 0.0, %v886
  %v888 = vpop.f32.mrf.mxu0
  %v889 = vadd.f32 0.0, %v888
  %890 = vmatmul.bf16.gmra.mxu0 %v759
  %v891 = vpop.f32.mrf.mxu0
  %v892 = vadd.f32 0.0, %v891
  %v893 = vpop.f32.mrf.mxu0
  %v894 = vadd.f32 0.0, %v893
  %895 = vmatmul.bf16.gmra.mxu0 %v761
  %v896 = vpop.f32.mrf.mxu0
  %v897 = vadd.f32 0.0, %v896
  %v898 = vpop.f32.mrf.mxu0
  %v899 = vadd.f32 0.0, %v898
  %900 = vmatmul.bf16.gmra.mxu0 %v763
  %v901 = vpop.f32.mrf.mxu0
  %v902 = vadd.f32 0.0, %v901
  %v903 = vpop.f32.mrf.mxu0
  %v904 = vadd.f32 0.0, %v903
  %905 = vdwg.mxu0
  %906 = vmatpush.bf16.msra.mxu0 0
  %907 = vmatpush.bf16.msra.mxu0 0
  %908 = vmatpush.bf16.msra.mxu0 0
  %909 = vmatpush.bf16.msra.mxu0 0
  %910 = vmatpush.bf16.msra.mxu0 0
  %911 = vmatpush.bf16.msra.mxu0 0
  %912 = vmatpush.bf16.msra.mxu0 0
  %913 = vmatpush.bf16.msra.mxu0 %v229
  %914 = vmatmul.bf16.gmra.mxu0 %v772
  %v915 = vpop.f32.mrf.mxu0
  %v916 = vadd.f32 %v877, %v915
  %v917 = vpop.f32.mrf.mxu0
  %v918 = vadd.f32 %v879, %v917
  %919 = vmatmul.bf16.gmra.mxu0 %v775
  %v920 = vpop.f32.mrf.mxu0
  %v921 = vadd.f32 %v882, %v920
  %v922 = vpop.f32.mrf.mxu0
  %v923 = vadd.f32 %v884, %v922
  %924 = vmatmul.bf16.gmra.mxu0 %v778
  %v925 = vpop.f32.mrf.mxu0
  %v926 = vadd.f32 %v887, %v925
  %v927 = vpop.f32.mrf.mxu0
  %v928 = vadd.f32 %v889, %v927
  %929 = vmatmul.bf16.gmra.mxu0 %v781
  %v930 = vpop.f32.mrf.mxu0
  %v931 = vadd.f32 %v892, %v930
  %v932 = vpop.f32.mrf.mxu0
  %v933 = vadd.f32 %v894, %v932
  %934 = vmatmul.bf16.gmra.mxu0 %v784
  %v935 = vpop.f32.mrf.mxu0
  %v936 = vadd.f32 %v897, %v935
  %v937 = vpop.f32.mrf.mxu0
  %v938 = vadd.f32 %v899, %v937
  %939 = vmatmul.bf16.gmra.mxu0 %v787
  %v940 = vpop.f32.mrf.mxu0
  %v941 = vadd.f32 %v902, %v940
  %v942 = vpop.f32.mrf.mxu0
  %v943 = vadd.f32 %v904, %v942
  %944 = vdwg.mxu0
  %s945 = scalar_lea.vmem %s0, 288
  %v946 = vld [vmem:[%s945] sm:$0xff]
  %v947 = vld [vmem:[%s945 + $0x8] sm:$0xff]
  %v948 = vld [vmem:[%s945 + $0x10] sm:$0xff]
  %v949 = vld [vmem:[%s945 + $0x18] sm:$0xff]
  %v950 = vld [vmem:[%s945 + $0x20] sm:$0xff]
  %v951 = vld [vmem:[%s945 + $0x28] sm:$0xff]
  %v952 = vld [vmem:[%s945 + $0x30] sm:$0xff]
  %v953 = vld [vmem:[%s945 + $0x38] sm:$0xff]
  %v954 = vld [vmem:[%s945 + $0x40] sm:$0xff]
  %v955 = vld [vmem:[%s945 + $0x48] sm:$0xff]
  %v956 = vld [vmem:[%s945 + $0x50] sm:$0xff]
  %v957 = vld [vmem:[%s945 + $0x58] sm:$0xff]
  %v970 = vunpack.c.l.b16 %v946
  %v971 = vunpack.c.h.b16 %v946
  %v972 = vunpack.c.l.b16 %v947
  %v973 = vunpack.c.h.b16 %v947
  %v974 = vunpack.c.l.b16 %v948
  %v975 = vunpack.c.h.b16 %v948
  %v976 = vunpack.c.l.b16 %v949
  %v977 = vunpack.c.h.b16 %v949
  %v978 = vunpack.c.l.b16 %v950
  %v979 = vunpack.c.h.b16 %v950
  %v980 = vunpack.c.l.b16 %v951
  %v981 = vunpack.c.h.b16 %v951
  %v982 = vunpack.c.l.b16 %v952
  %v983 = vunpack.c.h.b16 %v952
  %v984 = vunpack.c.l.b16 %v953
  %v985 = vunpack.c.h.b16 %v953
  %v986 = vunpack.c.l.b16 %v954
  %v987 = vunpack.c.h.b16 %v954
  %v988 = vunpack.c.l.b16 %v955
  %v989 = vunpack.c.h.b16 %v955
  %v990 = vunpack.c.l.b16 %v956
  %v991 = vunpack.c.h.b16 %v956
  %v992 = vunpack.c.l.b16 %v957
  %v993 = vunpack.c.h.b16 %v957
  %v994 = vpack.c.b16 %v972, %v970
  %v995 = vpack.c.b16 %v973, %v971
  %v996 = vpack.c.b16 %v976, %v974
  %v997 = vpack.c.b16 %v977, %v975
  %v998 = vpack.c.b16 %v980, %v978
  %v999 = vpack.c.b16 %v981, %v979
  %v1000 = vpack.c.b16 %v984, %v982
  %v1001 = vpack.c.b16 %v985, %v983
  %v1002 = vpack.c.b16 %v988, %v986
  %v1003 = vpack.c.b16 %v989, %v987
  %v1004 = vpack.c.b16 %v992, %v990
  %v1005 = vpack.c.b16 %v993, %v991
  %v1013 = vsel %vm205, %v995, 0
  %v1016 = vsel %vm205, %v997, 0
  %v1019 = vsel %vm205, %v999, 0
  %v1022 = vsel %vm205, %v1001, 0
  %v1025 = vsel %vm205, %v1003, 0
  %v1028 = vsel %vm205, %v1005, 0
  %1030 = vmatpush.bf16.msra.mxu0 %v185
  %1031 = vmatpush.bf16.msra.mxu0 %v183
  %1032 = vmatpush.bf16.msra.mxu0 %v181
  %1033 = vmatpush.bf16.msra.mxu0 %v179
  %1034 = vmatpush.bf16.msra.mxu0 %v177
  %1035 = vmatpush.bf16.msra.mxu0 %v175
  %1036 = vmatpush.bf16.msra.mxu0 %v173
  %1037 = vmatpush.bf16.msra.mxu0 %v171
  %1038 = vmatmul.bf16.gmra.mxu0 %v994
  %v1039 = vpop.f32.mrf.mxu0
  %v1040 = vadd.f32 0.0, %v1039
  %v1041 = vpop.f32.mrf.mxu0
  %v1042 = vadd.f32 0.0, %v1041
  %1043 = vmatmul.bf16.gmra.mxu0 %v996
  %v1044 = vpop.f32.mrf.mxu0
  %v1045 = vadd.f32 0.0, %v1044
  %v1046 = vpop.f32.mrf.mxu0
  %v1047 = vadd.f32 0.0, %v1046
  %1048 = vmatmul.bf16.gmra.mxu0 %v998
  %v1049 = vpop.f32.mrf.mxu0
  %v1050 = vadd.f32 0.0, %v1049
  %v1051 = vpop.f32.mrf.mxu0
  %v1052 = vadd.f32 0.0, %v1051
  %1053 = vmatmul.bf16.gmra.mxu0 %v1000
  %v1054 = vpop.f32.mrf.mxu0
  %v1055 = vadd.f32 0.0, %v1054
  %v1056 = vpop.f32.mrf.mxu0
  %v1057 = vadd.f32 0.0, %v1056
  %1058 = vmatmul.bf16.gmra.mxu0 %v1002
  %v1059 = vpop.f32.mrf.mxu0
  %v1060 = vadd.f32 0.0, %v1059
  %v1061 = vpop.f32.mrf.mxu0
  %v1062 = vadd.f32 0.0, %v1061
  %1063 = vmatmul.bf16.gmra.mxu0 %v1004
  %v1064 = vpop.f32.mrf.mxu0
  %v1065 = vadd.f32 0.0, %v1064
  %v1066 = vpop.f32.mrf.mxu0
  %v1067 = vadd.f32 0.0, %v1066
  %1068 = vdwg.mxu0
  %1069 = vmatpush.bf16.msra.mxu0 0
  %1070 = vmatpush.bf16.msra.mxu0 0
  %1071 = vmatpush.bf16.msra.mxu0 0
  %1072 = vmatpush.bf16.msra.mxu0 0
  %1073 = vmatpush.bf16.msra.mxu0 0
  %1074 = vmatpush.bf16.msra.mxu0 0
  %1075 = vmatpush.bf16.msra.mxu0 0
  %1076 = vmatpush.bf16.msra.mxu0 %v226
  %1077 = vmatmul.bf16.gmra.mxu0 %v1013
  %v1078 = vpop.f32.mrf.mxu0
  %v1079 = vadd.f32 %v1040, %v1078
  %v1080 = vpop.f32.mrf.mxu0
  %v1081 = vadd.f32 %v1042, %v1080
  %1082 = vmatmul.bf16.gmra.mxu0 %v1016
  %v1083 = vpop.f32.mrf.mxu0
  %v1084 = vadd.f32 %v1045, %v1083
  %v1085 = vpop.f32.mrf.mxu0
  %v1086 = vadd.f32 %v1047, %v1085
  %1087 = vmatmul.bf16.gmra.mxu0 %v1019
  %v1088 = vpop.f32.mrf.mxu0
  %v1089 = vadd.f32 %v1050, %v1088
  %v1090 = vpop.f32.mrf.mxu0
  %v1091 = vadd.f32 %v1052, %v1090
  %1092 = vmatmul.bf16.gmra.mxu0 %v1022
  %v1093 = vpop.f32.mrf.mxu0
  %v1094 = vadd.f32 %v1055, %v1093
  %v1095 = vpop.f32.mrf.mxu0
  %v1096 = vadd.f32 %v1057, %v1095
  %1097 = vmatmul.bf16.gmra.mxu0 %v1025
  %v1098 = vpop.f32.mrf.mxu0
  %v1099 = vadd.f32 %v1060, %v1098
  %v1100 = vpop.f32.mrf.mxu0
  %v1101 = vadd.f32 %v1062, %v1100
  %1102 = vmatmul.bf16.gmra.mxu0 %v1028
  %v1103 = vpop.f32.mrf.mxu0
  %v1104 = vadd.f32 %v1065, %v1103
  %v1105 = vpop.f32.mrf.mxu0
  %v1106 = vadd.f32 %v1067, %v1105
  %1107 = vdwg.mxu0
  %1108 = vmatpush.bf16.msra.mxu0 %v186
  %1109 = vmatpush.bf16.msra.mxu0 %v184
  %1110 = vmatpush.bf16.msra.mxu0 %v182
  %1111 = vmatpush.bf16.msra.mxu0 %v180
  %1112 = vmatpush.bf16.msra.mxu0 %v178
  %1113 = vmatpush.bf16.msra.mxu0 %v176
  %1114 = vmatpush.bf16.msra.mxu0 %v174
  %1115 = vmatpush.bf16.msra.mxu0 %v172
  %1116 = vmatmul.bf16.gmra.mxu0 %v994
  %v1117 = vpop.f32.mrf.mxu0
  %v1118 = vadd.f32 0.0, %v1117
  %v1119 = vpop.f32.mrf.mxu0
  %v1120 = vadd.f32 0.0, %v1119
  %1121 = vmatmul.bf16.gmra.mxu0 %v996
  %v1122 = vpop.f32.mrf.mxu0
  %v1123 = vadd.f32 0.0, %v1122
  %v1124 = vpop.f32.mrf.mxu0
  %v1125 = vadd.f32 0.0, %v1124
  %1126 = vmatmul.bf16.gmra.mxu0 %v998
  %v1127 = vpop.f32.mrf.mxu0
  %v1128 = vadd.f32 0.0, %v1127
  %v1129 = vpop.f32.mrf.mxu0
  %v1130 = vadd.f32 0.0, %v1129
  %1131 = vmatmul.bf16.gmra.mxu0 %v1000
  %v1132 = vpop.f32.mrf.mxu0
  %v1133 = vadd.f32 0.0, %v1132
  %v1134 = vpop.f32.mrf.mxu0
  %v1135 = vadd.f32 0.0, %v1134
  %1136 = vmatmul.bf16.gmra.mxu0 %v1002
  %v1137 = vpop.f32.mrf.mxu0
  %v1138 = vadd.f32 0.0, %v1137
  %v1139 = vpop.f32.mrf.mxu0
  %v1140 = vadd.f32 0.0, %v1139
  %1141 = vmatmul.bf16.gmra.mxu0 %v1004
  %v1142 = vpop.f32.mrf.mxu0
  %v1143 = vadd.f32 0.0, %v1142
  %v1144 = vpop.f32.mrf.mxu0
  %v1145 = vadd.f32 0.0, %v1144
  %1146 = vdwg.mxu0
  %1147 = vmatpush.bf16.msra.mxu0 0
  %1148 = vmatpush.bf16.msra.mxu0 0
  %1149 = vmatpush.bf16.msra.mxu0 0
  %1150 = vmatpush.bf16.msra.mxu0 0
  %1151 = vmatpush.bf16.msra.mxu0 0
  %1152 = vmatpush.bf16.msra.mxu0 0
  %1153 = vmatpush.bf16.msra.mxu0 0
  %1154 = vmatpush.bf16.msra.mxu0 %v229
  %1155 = vmatmul.bf16.gmra.mxu0 %v1013
  %v1156 = vpop.f32.mrf.mxu0
  %v1157 = vadd.f32 %v1118, %v1156
  %v1158 = vpop.f32.mrf.mxu0
  %v1159 = vadd.f32 %v1120, %v1158
  %1160 = vmatmul.bf16.gmra.mxu0 %v1016
  %v1161 = vpop.f32.mrf.mxu0
  %v1162 = vadd.f32 %v1123, %v1161
  %v1163 = vpop.f32.mrf.mxu0
  %v1164 = vadd.f32 %v1125, %v1163
  %1165 = vmatmul.bf16.gmra.mxu0 %v1019
  %v1166 = vpop.f32.mrf.mxu0
  %v1167 = vadd.f32 %v1128, %v1166
  %v1168 = vpop.f32.mrf.mxu0
  %v1169 = vadd.f32 %v1130, %v1168
  %1170 = vmatmul.bf16.gmra.mxu0 %v1022
  %v1171 = vpop.f32.mrf.mxu0
  %v1172 = vadd.f32 %v1133, %v1171
  %v1173 = vpop.f32.mrf.mxu0
  %v1174 = vadd.f32 %v1135, %v1173
  %1175 = vmatmul.bf16.gmra.mxu0 %v1025
  %v1176 = vpop.f32.mrf.mxu0
  %v1177 = vadd.f32 %v1138, %v1176
  %v1178 = vpop.f32.mrf.mxu0
  %v1179 = vadd.f32 %v1140, %v1178
  %1180 = vmatmul.bf16.gmra.mxu0 %v1028
  %v1181 = vpop.f32.mrf.mxu0
  %v1182 = vadd.f32 %v1143, %v1181
  %v1183 = vpop.f32.mrf.mxu0
  %v1184 = vadd.f32 %v1145, %v1183
  %1185 = vdwg.mxu0
  %v1186 = vmax.f32 %v838, %v1079
  %v1187 = vmax.f32 %v916, %v1157
  %v1188 = vmax.f32 %v840, %v1081
  %v1189 = vmax.f32 %v918, %v1159
  %v1190 = vmax.f32 %v843, %v1084
  %v1191 = vmax.f32 %v921, %v1162
  %v1192 = vmax.f32 %v845, %v1086
  %v1193 = vmax.f32 %v923, %v1164
  %v1194 = vmax.f32 %v848, %v1089
  %v1195 = vmax.f32 %v926, %v1167
  %v1196 = vmax.f32 %v850, %v1091
  %v1197 = vmax.f32 %v928, %v1169
  %v1198 = vmax.f32 %v853, %v1094
  %v1199 = vmax.f32 %v931, %v1172
  %v1200 = vmax.f32 %v855, %v1096
  %v1201 = vmax.f32 %v933, %v1174
  %v1202 = vmax.f32 %v858, %v1099
  %v1203 = vmax.f32 %v936, %v1177
  %v1204 = vmax.f32 %v860, %v1101
  %v1205 = vmax.f32 %v938, %v1179
  %v1206 = vmax.f32 %v863, %v1104
  %v1207 = vmax.f32 %v941, %v1182
  %v1208 = vmax.f32 %v865, %v1106
  %v1209 = vmax.f32 %v943, %v1184
  %v1210 = vmax.f32 %v1186, %v1187
  %v1211 = vmax.f32 %v1188, %v1189
  %v1212 = vmax.f32 %v1190, %v1191
  %v1213 = vmax.f32 %v1192, %v1193
  %v1214 = vmax.f32 %v1194, %v1195
  %v1215 = vmax.f32 %v1196, %v1197
  %v1216 = vmax.f32 %v1198, %v1199
  %v1217 = vmax.f32 %v1200, %v1201
  %v1218 = vmax.f32 %v1202, %v1203
  %v1219 = vmax.f32 %v1204, %v1205
  %v1220 = vmax.f32 %v1206, %v1207
  %v1221 = vmax.f32 %v1208, %v1209
  %v1222 = vadd.f32 %v1210, %v666
  %v1223 = vadd.f32 %v1211, %v666
  %v1224 = vadd.f32 %v1212, %v666
  %v1225 = vadd.f32 %v1213, %v666
  %v1226 = vadd.f32 %v1214, %v666
  %v1227 = vadd.f32 %v1215, %v666
  %v1228 = vadd.f32 %v1216, %v666
  %v1229 = vadd.f32 %v1217, %v666
  %v1230 = vadd.f32 %v1218, %v666
  %v1231 = vadd.f32 %v1219, %v666
  %v1232 = vadd.f32 %v1220, %v666
  %v1233 = vadd.f32 %v1221, %v666
  %v1234 = vmax.f32 %v1222, 0.0
  %v1235 = vmax.f32 %v1223, 0.0
  %v1236 = vmax.f32 %v1224, 0.0
  %v1237 = vmax.f32 %v1225, 0.0
  %v1238 = vmax.f32 %v1226, 0.0
  %v1239 = vmax.f32 %v1227, 0.0
  %v1240 = vmax.f32 %v1228, 0.0
  %v1241 = vmax.f32 %v1229, 0.0
  %v1242 = vmax.f32 %v1230, 0.0
  %v1243 = vmax.f32 %v1231, 0.0
  %v1244 = vmax.f32 %v1232, 0.0
  %v1245 = vmax.f32 %v1233, 0.0
  %v1246 = vpack.c.bf16 %v1234, %v1234
  %v1247 = vpack.c.bf16 %v1235, %v1235
  %v1248 = vpack.c.bf16 %v1236, %v1236
  %v1249 = vpack.c.bf16 %v1237, %v1237
  %v1250 = vpack.c.bf16 %v1238, %v1238
  %v1251 = vpack.c.bf16 %v1239, %v1239
  %v1252 = vpack.c.bf16 %v1240, %v1240
  %v1253 = vpack.c.bf16 %v1241, %v1241
  %v1254 = vpack.c.bf16 %v1242, %v1242
  %v1255 = vpack.c.bf16 %v1243, %v1243
  %v1256 = vpack.c.bf16 %v1244, %v1244
  %v1257 = vpack.c.bf16 %v1245, %v1245
  %v1258 = vld [vmem:[%s3] sm:$0xff]
  %v1259 = vld [vmem:[%s3 + $0x8] sm:$0xff]
  %v1260 = vld [vmem:[%s3 + $0x10] sm:$0xff]
  %v1261 = vld [vmem:[%s3 + $0x18] sm:$0xff]
  %v1262 = vld [vmem:[%s3 + $0x20] sm:$0xff]
  %v1263 = vld [vmem:[%s3 + $0x28] sm:$0xff]
  %v1264 = vld [vmem:[%s3 + $0x30] sm:$0xff]
  %v1265 = vld [vmem:[%s3 + $0x38] sm:$0xff]
  %v1266 = vld [vmem:[%s3 + $0x40] sm:$0xff]
  %v1267 = vld [vmem:[%s3 + $0x48] sm:$0xff]
  %v1268 = vld [vmem:[%s3 + $0x50] sm:$0xff]
  %v1269 = vld [vmem:[%s3 + $0x58] sm:$0xff]
  %v1270 = vld [vmem:[%s3 + $0x60] sm:$0xff]
  %v1271 = vld [vmem:[%s3 + $0x68] sm:$0xff]
  %v1272 = vld [vmem:[%s3 + $0x70] sm:$0xff]
  %v1273 = vld [vmem:[%s3 + $0x78] sm:$0xff]
  %s1274 = scalar_lea.vmem %s3, 128
  %v1275 = vld [vmem:[%s1274] sm:$0xff]
  %v1276 = vld [vmem:[%s1274 + $0x8] sm:$0xff]
  %v1277 = vld [vmem:[%s1274 + $0x10] sm:$0xff]
  %v1278 = vld [vmem:[%s1274 + $0x18] sm:$0xff]
  %v1279 = vld [vmem:[%s1274 + $0x20] sm:$0xff]
  %v1280 = vld [vmem:[%s1274 + $0x28] sm:$0xff]
  %v1281 = vld [vmem:[%s1274 + $0x30] sm:$0xff]
  %v1282 = vld [vmem:[%s1274 + $0x38] sm:$0xff]
  %v1283 = vld [vmem:[%s1274 + $0x40] sm:$0xff]
  %v1284 = vld [vmem:[%s1274 + $0x48] sm:$0xff]
  %v1285 = vld [vmem:[%s1274 + $0x50] sm:$0xff]
  %v1286 = vld [vmem:[%s1274 + $0x58] sm:$0xff]
  %v1287 = vld [vmem:[%s1274 + $0x60] sm:$0xff]
  %v1288 = vld [vmem:[%s1274 + $0x68] sm:$0xff]
  %v1289 = vld [vmem:[%s1274 + $0x70] sm:$0xff]
  %v1290 = vld [vmem:[%s1274 + $0x78] sm:$0xff]
  %v1299 = vunpack.c.l.b16 %v1246
  %v1300 = vunpack.c.l.b16 %v1247
  %v1301 = vunpack.c.l.b16 %v1248
  %v1302 = vunpack.c.l.b16 %v1249
  %v1303 = vunpack.c.l.b16 %v1250
  %v1304 = vunpack.c.l.b16 %v1251
  %v1305 = vunpack.c.l.b16 %v1252
  %v1306 = vunpack.c.l.b16 %v1253
  %v1307 = vpack.c.b16 %v1300, %v1299
  %v1308 = vpack.c.b16 %v1302, %v1301
  %v1309 = vpack.c.b16 %v1304, %v1303
  %v1310 = vpack.c.b16 %v1306, %v1305
  %v1331 = vunpack.c.l.b16 %v1275
  %v1332 = vunpack.c.h.b16 %v1275
  %v1333 = vunpack.c.l.b16 %v1276
  %v1334 = vunpack.c.h.b16 %v1276
  %v1335 = vunpack.c.l.b16 %v1277
  %v1336 = vunpack.c.h.b16 %v1277
  %v1337 = vunpack.c.l.b16 %v1278
  %v1338 = vunpack.c.h.b16 %v1278
  %v1339 = vunpack.c.l.b16 %v1279
  %v1340 = vunpack.c.h.b16 %v1279
  %v1341 = vunpack.c.l.b16 %v1280
  %v1342 = vunpack.c.h.b16 %v1280
  %v1343 = vunpack.c.l.b16 %v1281
  %v1344 = vunpack.c.h.b16 %v1281
  %v1345 = vunpack.c.l.b16 %v1282
  %v1346 = vunpack.c.h.b16 %v1282
  %v1347 = vunpack.c.l.b16 %v1283
  %v1348 = vunpack.c.h.b16 %v1283
  %v1349 = vunpack.c.l.b16 %v1284
  %v1350 = vunpack.c.h.b16 %v1284
  %v1351 = vunpack.c.l.b16 %v1285
  %v1352 = vunpack.c.h.b16 %v1285
  %v1353 = vunpack.c.l.b16 %v1286
  %v1354 = vunpack.c.h.b16 %v1286
  %v1355 = vunpack.c.l.b16 %v1287
  %v1356 = vunpack.c.h.b16 %v1287
  %v1357 = vunpack.c.l.b16 %v1288
  %v1358 = vunpack.c.h.b16 %v1288
  %v1359 = vunpack.c.l.b16 %v1289
  %v1360 = vunpack.c.h.b16 %v1289
  %v1361 = vunpack.c.l.b16 %v1290
  %v1362 = vunpack.c.h.b16 %v1290
  %v1363 = vpack.c.b16 %v1333, %v1331
  %v1364 = vpack.c.b16 %v1334, %v1332
  %v1365 = vpack.c.b16 %v1337, %v1335
  %v1366 = vpack.c.b16 %v1338, %v1336
  %v1367 = vpack.c.b16 %v1341, %v1339
  %v1368 = vpack.c.b16 %v1342, %v1340
  %v1369 = vpack.c.b16 %v1345, %v1343
  %v1370 = vpack.c.b16 %v1346, %v1344
  %v1371 = vpack.c.b16 %v1349, %v1347
  %v1372 = vpack.c.b16 %v1350, %v1348
  %v1373 = vpack.c.b16 %v1353, %v1351
  %v1374 = vpack.c.b16 %v1354, %v1352
  %v1375 = vpack.c.b16 %v1357, %v1355
  %v1376 = vpack.c.b16 %v1358, %v1356
  %v1377 = vpack.c.b16 %v1361, %v1359
  %v1378 = vpack.c.b16 %v1362, %v1360
  %1395 = vmatpush.bf16.msra.mxu0 %v1377
  %1396 = vmatpush.bf16.msra.mxu0 %v1375
  %1397 = vmatpush.bf16.msra.mxu0 %v1373
  %1398 = vmatpush.bf16.msra.mxu0 %v1371
  %1399 = vmatpush.bf16.msra.mxu0 %v1369
  %1400 = vmatpush.bf16.msra.mxu0 %v1367
  %1401 = vmatpush.bf16.msra.mxu0 %v1365
  %1402 = vmatpush.bf16.msra.mxu0 %v1363
  %1403 = vmatmul.bf16.gmra.mxu0 %v1307
  %v1404 = vpop.f32.mrf.mxu0
  %v1405 = vadd.f32 0.0, %v1404
  %v1406 = vpop.f32.mrf.mxu0
  %v1407 = vadd.f32 0.0, %v1406
  %1408 = vmatmul.bf16.gmra.mxu0 %v1308
  %v1409 = vpop.f32.mrf.mxu0
  %v1410 = vadd.f32 0.0, %v1409
  %v1411 = vpop.f32.mrf.mxu0
  %v1412 = vadd.f32 0.0, %v1411
  %1413 = vmatmul.bf16.gmra.mxu0 %v1309
  %v1414 = vpop.f32.mrf.mxu0
  %v1415 = vadd.f32 0.0, %v1414
  %v1416 = vpop.f32.mrf.mxu0
  %v1417 = vadd.f32 0.0, %v1416
  %1418 = vmatmul.bf16.gmra.mxu0 %v1310
  %v1419 = vpop.f32.mrf.mxu0
  %v1420 = vadd.f32 0.0, %v1419
  %v1421 = vpop.f32.mrf.mxu0
  %v1422 = vadd.f32 0.0, %v1421
  %1423 = vdwg.mxu0
  %1424 = vmatpush.bf16.msra.mxu0 %v1378
  %1425 = vmatpush.bf16.msra.mxu0 %v1376
  %1426 = vmatpush.bf16.msra.mxu0 %v1374
  %1427 = vmatpush.bf16.msra.mxu0 %v1372
  %1428 = vmatpush.bf16.msra.mxu0 %v1370
  %1429 = vmatpush.bf16.msra.mxu0 %v1368
  %1430 = vmatpush.bf16.msra.mxu0 %v1366
  %1431 = vmatpush.bf16.msra.mxu0 %v1364
  %1432 = vmatmul.bf16.gmra.mxu0 %v1307
  %v1433 = vpop.f32.mrf.mxu0
  %v1434 = vadd.f32 0.0, %v1433
  %v1435 = vpop.f32.mrf.mxu0
  %v1436 = vadd.f32 0.0, %v1435
  %1437 = vmatmul.bf16.gmra.mxu0 %v1308
  %v1438 = vpop.f32.mrf.mxu0
  %v1439 = vadd.f32 0.0, %v1438
  %v1440 = vpop.f32.mrf.mxu0
  %v1441 = vadd.f32 0.0, %v1440
  %1442 = vmatmul.bf16.gmra.mxu0 %v1309
  %v1443 = vpop.f32.mrf.mxu0
  %v1444 = vadd.f32 0.0, %v1443
  %v1445 = vpop.f32.mrf.mxu0
  %v1446 = vadd.f32 0.0, %v1445
  %1447 = vmatmul.bf16.gmra.mxu0 %v1310
  %v1448 = vpop.f32.mrf.mxu0
  %v1449 = vadd.f32 0.0, %v1448
  %v1450 = vpop.f32.mrf.mxu0
  %v1451 = vadd.f32 0.0, %v1450
  %1452 = vdwg.mxu0
  %v1461 = vunpack.c.l.b16 %v692
  %v1462 = vunpack.c.l.b16 %v693
  %v1463 = vunpack.c.l.b16 %v694
  %v1464 = vunpack.c.l.b16 %v695
  %v1465 = vunpack.c.l.b16 %v696
  %v1466 = vunpack.c.l.b16 %v697
  %v1467 = vunpack.c.l.b16 %v698
  %v1468 = vunpack.c.l.b16 %v699
  %v1469 = vpack.c.b16 %v1462, %v1461
  %v1470 = vpack.c.b16 %v1464, %v1463
  %v1471 = vpack.c.b16 %v1466, %v1465
  %v1472 = vpack.c.b16 %v1468, %v1467
  %v1493 = vunpack.c.l.b16 %v1258
  %v1494 = vunpack.c.h.b16 %v1258
  %v1495 = vunpack.c.l.b16 %v1259
  %v1496 = vunpack.c.h.b16 %v1259
  %v1497 = vunpack.c.l.b16 %v1260
  %v1498 = vunpack.c.h.b16 %v1260
  %v1499 = vunpack.c.l.b16 %v1261
  %v1500 = vunpack.c.h.b16 %v1261
  %v1501 = vunpack.c.l.b16 %v1262
  %v1502 = vunpack.c.h.b16 %v1262
  %v1503 = vunpack.c.l.b16 %v1263
  %v1504 = vunpack.c.h.b16 %v1263
  %v1505 = vunpack.c.l.b16 %v1264
  %v1506 = vunpack.c.h.b16 %v1264
  %v1507 = vunpack.c.l.b16 %v1265
  %v1508 = vunpack.c.h.b16 %v1265
  %v1509 = vunpack.c.l.b16 %v1266
  %v1510 = vunpack.c.h.b16 %v1266
  %v1511 = vunpack.c.l.b16 %v1267
  %v1512 = vunpack.c.h.b16 %v1267
  %v1513 = vunpack.c.l.b16 %v1268
  %v1514 = vunpack.c.h.b16 %v1268
  %v1515 = vunpack.c.l.b16 %v1269
  %v1516 = vunpack.c.h.b16 %v1269
  %v1517 = vunpack.c.l.b16 %v1270
  %v1518 = vunpack.c.h.b16 %v1270
  %v1519 = vunpack.c.l.b16 %v1271
  %v1520 = vunpack.c.h.b16 %v1271
  %v1521 = vunpack.c.l.b16 %v1272
  %v1522 = vunpack.c.h.b16 %v1272
  %v1523 = vunpack.c.l.b16 %v1273
  %v1524 = vunpack.c.h.b16 %v1273
  %v1525 = vpack.c.b16 %v1495, %v1493
  %v1526 = vpack.c.b16 %v1496, %v1494
  %v1527 = vpack.c.b16 %v1499, %v1497
  %v1528 = vpack.c.b16 %v1500, %v1498
  %v1529 = vpack.c.b16 %v1503, %v1501
  %v1530 = vpack.c.b16 %v1504, %v1502
  %v1531 = vpack.c.b16 %v1507, %v1505
  %v1532 = vpack.c.b16 %v1508, %v1506
  %v1533 = vpack.c.b16 %v1511, %v1509
  %v1534 = vpack.c.b16 %v1512, %v1510
  %v1535 = vpack.c.b16 %v1515, %v1513
  %v1536 = vpack.c.b16 %v1516, %v1514
  %v1537 = vpack.c.b16 %v1519, %v1517
  %v1538 = vpack.c.b16 %v1520, %v1518
  %v1539 = vpack.c.b16 %v1523, %v1521
  %v1540 = vpack.c.b16 %v1524, %v1522
  %1557 = vmatpush.bf16.msra.mxu0 %v1539
  %1558 = vmatpush.bf16.msra.mxu0 %v1537
  %1559 = vmatpush.bf16.msra.mxu0 %v1535
  %1560 = vmatpush.bf16.msra.mxu0 %v1533
  %1561 = vmatpush.bf16.msra.mxu0 %v1531
  %1562 = vmatpush.bf16.msra.mxu0 %v1529
  %1563 = vmatpush.bf16.msra.mxu0 %v1527
  %1564 = vmatpush.bf16.msra.mxu0 %v1525
  %1565 = vmatmul.bf16.gmra.mxu0 %v1469
  %v1566 = vpop.f32.mrf.mxu0
  %v1567 = vadd.f32 %v1405, %v1566
  %v1568 = vpop.f32.mrf.mxu0
  %v1569 = vadd.f32 %v1407, %v1568
  %1570 = vmatmul.bf16.gmra.mxu0 %v1470
  %v1571 = vpop.f32.mrf.mxu0
  %v1572 = vadd.f32 %v1410, %v1571
  %v1573 = vpop.f32.mrf.mxu0
  %v1574 = vadd.f32 %v1412, %v1573
  %1575 = vmatmul.bf16.gmra.mxu0 %v1471
  %v1576 = vpop.f32.mrf.mxu0
  %v1577 = vadd.f32 %v1415, %v1576
  %v1578 = vpop.f32.mrf.mxu0
  %v1579 = vadd.f32 %v1417, %v1578
  %1580 = vmatmul.bf16.gmra.mxu0 %v1472
  %v1581 = vpop.f32.mrf.mxu0
  %v1582 = vadd.f32 %v1420, %v1581
  %v1583 = vpop.f32.mrf.mxu0
  %v1584 = vadd.f32 %v1422, %v1583
  %1585 = vdwg.mxu0
  %1586 = vmatpush.bf16.msra.mxu0 %v1540
  %1587 = vmatpush.bf16.msra.mxu0 %v1538
  %1588 = vmatpush.bf16.msra.mxu0 %v1536
  %1589 = vmatpush.bf16.msra.mxu0 %v1534
  %1590 = vmatpush.bf16.msra.mxu0 %v1532
  %1591 = vmatpush.bf16.msra.mxu0 %v1530
  %1592 = vmatpush.bf16.msra.mxu0 %v1528
  %1593 = vmatpush.bf16.msra.mxu0 %v1526
  %1594 = vmatmul.bf16.gmra.mxu0 %v1469
  %v1595 = vpop.f32.mrf.mxu0
  %v1596 = vadd.f32 %v1434, %v1595
  %v1597 = vpop.f32.mrf.mxu0
  %v1598 = vadd.f32 %v1436, %v1597
  %1599 = vmatmul.bf16.gmra.mxu0 %v1470
  %v1600 = vpop.f32.mrf.mxu0
  %v1601 = vadd.f32 %v1439, %v1600
  %v1602 = vpop.f32.mrf.mxu0
  %v1603 = vadd.f32 %v1441, %v1602
  %1604 = vmatmul.bf16.gmra.mxu0 %v1471
  %v1605 = vpop.f32.mrf.mxu0
  %v1606 = vadd.f32 %v1444, %v1605
  %v1607 = vpop.f32.mrf.mxu0
  %v1608 = vadd.f32 %v1446, %v1607
  %1609 = vmatmul.bf16.gmra.mxu0 %v1472
  %v1610 = vpop.f32.mrf.mxu0
  %v1611 = vadd.f32 %v1449, %v1610
  %v1612 = vpop.f32.mrf.mxu0
  %v1613 = vadd.f32 %v1451, %v1612
  %1614 = vdwg.mxu0
  %s1615 = scalar_lea.vmem %s3, 256
  %v1616 = vld [vmem:[%s1615] sm:$0xff]
  %v1617 = vld [vmem:[%s1615 + $0x8] sm:$0xff]
  %v1618 = vld [vmem:[%s1615 + $0x10] sm:$0xff]
  %v1619 = vld [vmem:[%s1615 + $0x18] sm:$0xff]
  %v1620 = vld [vmem:[%s1615 + $0x20] sm:$0xff]
  %v1621 = vld [vmem:[%s1615 + $0x28] sm:$0xff]
  %v1622 = vld [vmem:[%s1615 + $0x30] sm:$0xff]
  %v1623 = vld [vmem:[%s1615 + $0x38] sm:$0xff]
  %v1624 = vld [vmem:[%s1615 + $0x40] sm:$0xff]
  %v1625 = vld [vmem:[%s1615 + $0x48] sm:$0xff]
  %v1626 = vld [vmem:[%s1615 + $0x50] sm:$0xff]
  %v1627 = vld [vmem:[%s1615 + $0x58] sm:$0xff]
  %v1628 = vld [vmem:[%s1615 + $0x60] sm:$0xff]
  %v1629 = vld [vmem:[%s1615 + $0x68] sm:$0xff]
  %v1630 = vld [vmem:[%s1615 + $0x70] sm:$0xff]
  %v1631 = vld [vmem:[%s1615 + $0x78] sm:$0xff]
  %v1634 = vunpack.c.l.b16 %v700
  %v1635 = vunpack.c.l.b16 %v701
  %v1636 = vpack.c.b16 %v1635, %v1634
  %v1654 = vunpack.c.l.b16 %v1616
  %v1655 = vunpack.c.h.b16 %v1616
  %v1656 = vunpack.c.l.b16 %v1617
  %v1657 = vunpack.c.h.b16 %v1617
  %v1658 = vunpack.c.l.b16 %v1618
  %v1659 = vunpack.c.h.b16 %v1618
  %v1660 = vunpack.c.l.b16 %v1619
  %v1661 = vunpack.c.h.b16 %v1619
  %v1662 = vunpack.c.l.b16 %v1620
  %v1663 = vunpack.c.h.b16 %v1620
  %v1664 = vunpack.c.l.b16 %v1621
  %v1665 = vunpack.c.h.b16 %v1621
  %v1666 = vunpack.c.l.b16 %v1622
  %v1667 = vunpack.c.h.b16 %v1622
  %v1668 = vunpack.c.l.b16 %v1623
  %v1669 = vunpack.c.h.b16 %v1623
  %v1670 = vunpack.c.l.b16 %v1624
  %v1671 = vunpack.c.h.b16 %v1624
  %v1672 = vunpack.c.l.b16 %v1625
  %v1673 = vunpack.c.h.b16 %v1625
  %v1674 = vunpack.c.l.b16 %v1626
  %v1675 = vunpack.c.h.b16 %v1626
  %v1676 = vunpack.c.l.b16 %v1627
  %v1677 = vunpack.c.h.b16 %v1627
  %v1678 = vunpack.c.l.b16 %v1628
  %v1679 = vunpack.c.h.b16 %v1628
  %v1680 = vunpack.c.l.b16 %v1629
  %v1681 = vunpack.c.h.b16 %v1629
  %v1682 = vunpack.c.l.b16 %v1630
  %v1683 = vunpack.c.h.b16 %v1630
  %v1684 = vunpack.c.l.b16 %v1631
  %v1685 = vunpack.c.h.b16 %v1631
  %v1686 = vpack.c.b16 %v1656, %v1654
  %v1687 = vpack.c.b16 %v1657, %v1655
  %v1688 = vpack.c.b16 %v1660, %v1658
  %v1689 = vpack.c.b16 %v1661, %v1659
  %v1690 = vpack.c.b16 %v1664, %v1662
  %v1691 = vpack.c.b16 %v1665, %v1663
  %v1692 = vpack.c.b16 %v1668, %v1666
  %v1693 = vpack.c.b16 %v1669, %v1667
  %v1694 = vpack.c.b16 %v1672, %v1670
  %v1695 = vpack.c.b16 %v1673, %v1671
  %v1696 = vpack.c.b16 %v1676, %v1674
  %v1697 = vpack.c.b16 %v1677, %v1675
  %v1698 = vpack.c.b16 %v1680, %v1678
  %v1699 = vpack.c.b16 %v1681, %v1679
  %v1700 = vpack.c.b16 %v1684, %v1682
  %v1701 = vpack.c.b16 %v1685, %v1683
  %1718 = vmatpush.bf16.msra.mxu0 %v1700
  %1719 = vmatpush.bf16.msra.mxu0 %v1698
  %1720 = vmatpush.bf16.msra.mxu0 %v1696
  %1721 = vmatpush.bf16.msra.mxu0 %v1694
  %1722 = vmatpush.bf16.msra.mxu0 %v1692
  %1723 = vmatpush.bf16.msra.mxu0 %v1690
  %1724 = vmatpush.bf16.msra.mxu0 %v1688
  %1725 = vmatpush.bf16.msra.mxu0 %v1686
  %1726 = vmatmul.bf16.gmra.mxu0 %v1470
  %v1727 = vpop.f32.mrf.mxu0
  %v1728 = vadd.f32 0.0, %v1727
  %v1729 = vpop.f32.mrf.mxu0
  %v1730 = vadd.f32 0.0, %v1729
  %1731 = vmatmul.bf16.gmra.mxu0 %v1471
  %v1732 = vpop.f32.mrf.mxu0
  %v1733 = vadd.f32 0.0, %v1732
  %v1734 = vpop.f32.mrf.mxu0
  %v1735 = vadd.f32 0.0, %v1734
  %1736 = vmatmul.bf16.gmra.mxu0 %v1472
  %v1737 = vpop.f32.mrf.mxu0
  %v1738 = vadd.f32 0.0, %v1737
  %v1739 = vpop.f32.mrf.mxu0
  %v1740 = vadd.f32 0.0, %v1739
  %1741 = vmatmul.bf16.gmra.mxu0 %v1636
  %v1742 = vpop.f32.mrf.mxu0
  %v1743 = vadd.f32 0.0, %v1742
  %v1744 = vpop.f32.mrf.mxu0
  %v1745 = vadd.f32 0.0, %v1744
  %1746 = vdwg.mxu0
  %1747 = vmatpush.bf16.msra.mxu0 %v1701
  %1748 = vmatpush.bf16.msra.mxu0 %v1699
  %1749 = vmatpush.bf16.msra.mxu0 %v1697
  %1750 = vmatpush.bf16.msra.mxu0 %v1695
  %1751 = vmatpush.bf16.msra.mxu0 %v1693
  %1752 = vmatpush.bf16.msra.mxu0 %v1691
  %1753 = vmatpush.bf16.msra.mxu0 %v1689
  %1754 = vmatpush.bf16.msra.mxu0 %v1687
  %1755 = vmatmul.bf16.gmra.mxu0 %v1470
  %v1756 = vpop.f32.mrf.mxu0
  %v1757 = vadd.f32 0.0, %v1756
  %v1758 = vpop.f32.mrf.mxu0
  %v1759 = vadd.f32 0.0, %v1758
  %1760 = vmatmul.bf16.gmra.mxu0 %v1471
  %v1761 = vpop.f32.mrf.mxu0
  %v1762 = vadd.f32 0.0, %v1761
  %v1763 = vpop.f32.mrf.mxu0
  %v1764 = vadd.f32 0.0, %v1763
  %1765 = vmatmul.bf16.gmra.mxu0 %v1472
  %v1766 = vpop.f32.mrf.mxu0
  %v1767 = vadd.f32 0.0, %v1766
  %v1768 = vpop.f32.mrf.mxu0
  %v1769 = vadd.f32 0.0, %v1768
  %1770 = vmatmul.bf16.gmra.mxu0 %v1636
  %v1771 = vpop.f32.mrf.mxu0
  %v1772 = vadd.f32 0.0, %v1771
  %v1773 = vpop.f32.mrf.mxu0
  %v1774 = vadd.f32 0.0, %v1773
  %1775 = vdwg.mxu0
  %v1776 = vadd.f32 %v1567, %v1728
  %v1777 = vadd.f32 %v1596, %v1757
  %v1778 = vadd.f32 %v1569, %v1730
  %v1779 = vadd.f32 %v1598, %v1759
  %v1780 = vadd.f32 %v1572, %v1733
  %v1781 = vadd.f32 %v1601, %v1762
  %v1782 = vadd.f32 %v1574, %v1735
  %v1783 = vadd.f32 %v1603, %v1764
  %v1784 = vadd.f32 %v1577, %v1738
  %v1785 = vadd.f32 %v1606, %v1767
  %v1786 = vadd.f32 %v1579, %v1740
  %v1787 = vadd.f32 %v1608, %v1769
  %v1788 = vadd.f32 %v1582, %v1743
  %v1789 = vadd.f32 %v1611, %v1772
  %v1790 = vadd.f32 %v1584, %v1745
  %v1791 = vadd.f32 %v1613, %v1774
  %s1792 = scalar_lea.vmem %s3, 384
  %v1793 = vld [vmem:[%s1792] sm:$0xff]
  %v1794 = vld [vmem:[%s1792 + $0x8] sm:$0xff]
  %v1795 = vld [vmem:[%s1792 + $0x10] sm:$0xff]
  %v1796 = vld [vmem:[%s1792 + $0x18] sm:$0xff]
  %v1797 = vld [vmem:[%s1792 + $0x20] sm:$0xff]
  %v1798 = vld [vmem:[%s1792 + $0x28] sm:$0xff]
  %v1799 = vld [vmem:[%s1792 + $0x30] sm:$0xff]
  %v1800 = vld [vmem:[%s1792 + $0x38] sm:$0xff]
  %v1801 = vld [vmem:[%s1792 + $0x40] sm:$0xff]
  %v1802 = vld [vmem:[%s1792 + $0x48] sm:$0xff]
  %v1803 = vld [vmem:[%s1792 + $0x50] sm:$0xff]
  %v1804 = vld [vmem:[%s1792 + $0x58] sm:$0xff]
  %v1805 = vld [vmem:[%s1792 + $0x60] sm:$0xff]
  %v1806 = vld [vmem:[%s1792 + $0x68] sm:$0xff]
  %v1807 = vld [vmem:[%s1792 + $0x70] sm:$0xff]
  %v1808 = vld [vmem:[%s1792 + $0x78] sm:$0xff]
  %v1811 = vunpack.c.l.b16 %v1254
  %v1812 = vunpack.c.l.b16 %v1255
  %v1813 = vpack.c.b16 %v1812, %v1811
  %v1831 = vunpack.c.l.b16 %v1793
  %v1832 = vunpack.c.h.b16 %v1793
  %v1833 = vunpack.c.l.b16 %v1794
  %v1834 = vunpack.c.h.b16 %v1794
  %v1835 = vunpack.c.l.b16 %v1795
  %v1836 = vunpack.c.h.b16 %v1795
  %v1837 = vunpack.c.l.b16 %v1796
  %v1838 = vunpack.c.h.b16 %v1796
  %v1839 = vunpack.c.l.b16 %v1797
  %v1840 = vunpack.c.h.b16 %v1797
  %v1841 = vunpack.c.l.b16 %v1798
  %v1842 = vunpack.c.h.b16 %v1798
  %v1843 = vunpack.c.l.b16 %v1799
  %v1844 = vunpack.c.h.b16 %v1799
  %v1845 = vunpack.c.l.b16 %v1800
  %v1846 = vunpack.c.h.b16 %v1800
  %v1847 = vunpack.c.l.b16 %v1801
  %v1848 = vunpack.c.h.b16 %v1801
  %v1849 = vunpack.c.l.b16 %v1802
  %v1850 = vunpack.c.h.b16 %v1802
  %v1851 = vunpack.c.l.b16 %v1803
  %v1852 = vunpack.c.h.b16 %v1803
  %v1853 = vunpack.c.l.b16 %v1804
  %v1854 = vunpack.c.h.b16 %v1804
  %v1855 = vunpack.c.l.b16 %v1805
  %v1856 = vunpack.c.h.b16 %v1805
  %v1857 = vunpack.c.l.b16 %v1806
  %v1858 = vunpack.c.h.b16 %v1806
  %v1859 = vunpack.c.l.b16 %v1807
  %v1860 = vunpack.c.h.b16 %v1807
  %v1861 = vunpack.c.l.b16 %v1808
  %v1862 = vunpack.c.h.b16 %v1808
  %v1863 = vpack.c.b16 %v1833, %v1831
  %v1864 = vpack.c.b16 %v1834, %v1832
  %v1865 = vpack.c.b16 %v1837, %v1835
  %v1866 = vpack.c.b16 %v1838, %v1836
  %v1867 = vpack.c.b16 %v1841, %v1839
  %v1868 = vpack.c.b16 %v1842, %v1840
  %v1869 = vpack.c.b16 %v1845, %v1843
  %v1870 = vpack.c.b16 %v1846, %v1844
  %v1871 = vpack.c.b16 %v1849, %v1847
  %v1872 = vpack.c.b16 %v1850, %v1848
  %v1873 = vpack.c.b16 %v1853, %v1851
  %v1874 = vpack.c.b16 %v1854, %v1852
  %v1875 = vpack.c.b16 %v1857, %v1855
  %v1876 = vpack.c.b16 %v1858, %v1856
  %v1877 = vpack.c.b16 %v1861, %v1859
  %v1878 = vpack.c.b16 %v1862, %v1860
  %1895 = vmatpush.bf16.msra.mxu0 %v1877
  %1896 = vmatpush.bf16.msra.mxu0 %v1875
  %1897 = vmatpush.bf16.msra.mxu0 %v1873
  %1898 = vmatpush.bf16.msra.mxu0 %v1871
  %1899 = vmatpush.bf16.msra.mxu0 %v1869
  %1900 = vmatpush.bf16.msra.mxu0 %v1867
  %1901 = vmatpush.bf16.msra.mxu0 %v1865
  %1902 = vmatpush.bf16.msra.mxu0 %v1863
  %1903 = vmatmul.bf16.gmra.mxu0 %v1308
  %v1904 = vpop.f32.mrf.mxu0
  %v1905 = vadd.f32 0.0, %v1904
  %v1906 = vpop.f32.mrf.mxu0
  %v1907 = vadd.f32 0.0, %v1906
  %1908 = vmatmul.bf16.gmra.mxu0 %v1309
  %v1909 = vpop.f32.mrf.mxu0
  %v1910 = vadd.f32 0.0, %v1909
  %v1911 = vpop.f32.mrf.mxu0
  %v1912 = vadd.f32 0.0, %v1911
  %1913 = vmatmul.bf16.gmra.mxu0 %v1310
  %v1914 = vpop.f32.mrf.mxu0
  %v1915 = vadd.f32 0.0, %v1914
  %v1916 = vpop.f32.mrf.mxu0
  %v1917 = vadd.f32 0.0, %v1916
  %1918 = vmatmul.bf16.gmra.mxu0 %v1813
  %v1919 = vpop.f32.mrf.mxu0
  %v1920 = vadd.f32 0.0, %v1919
  %v1921 = vpop.f32.mrf.mxu0
  %v1922 = vadd.f32 0.0, %v1921
  %1923 = vdwg.mxu0
  %1924 = vmatpush.bf16.msra.mxu0 %v1878
  %1925 = vmatpush.bf16.msra.mxu0 %v1876
  %1926 = vmatpush.bf16.msra.mxu0 %v1874
  %1927 = vmatpush.bf16.msra.mxu0 %v1872
  %1928 = vmatpush.bf16.msra.mxu0 %v1870
  %1929 = vmatpush.bf16.msra.mxu0 %v1868
  %1930 = vmatpush.bf16.msra.mxu0 %v1866
  %1931 = vmatpush.bf16.msra.mxu0 %v1864
  %1932 = vmatmul.bf16.gmra.mxu0 %v1308
  %v1933 = vpop.f32.mrf.mxu0
  %v1934 = vadd.f32 0.0, %v1933
  %v1935 = vpop.f32.mrf.mxu0
  %v1936 = vadd.f32 0.0, %v1935
  %1937 = vmatmul.bf16.gmra.mxu0 %v1309
  %v1938 = vpop.f32.mrf.mxu0
  %v1939 = vadd.f32 0.0, %v1938
  %v1940 = vpop.f32.mrf.mxu0
  %v1941 = vadd.f32 0.0, %v1940
  %1942 = vmatmul.bf16.gmra.mxu0 %v1310
  %v1943 = vpop.f32.mrf.mxu0
  %v1944 = vadd.f32 0.0, %v1943
  %v1945 = vpop.f32.mrf.mxu0
  %v1946 = vadd.f32 0.0, %v1945
  %1947 = vmatmul.bf16.gmra.mxu0 %v1813
  %v1948 = vpop.f32.mrf.mxu0
  %v1949 = vadd.f32 0.0, %v1948
  %v1950 = vpop.f32.mrf.mxu0
  %v1951 = vadd.f32 0.0, %v1950
  %1952 = vdwg.mxu0
  %v1953 = vadd.f32 %v1776, %v1905
  %v1954 = vadd.f32 %v1777, %v1934
  %v1955 = vadd.f32 %v1778, %v1907
  %v1956 = vadd.f32 %v1779, %v1936
  %v1957 = vadd.f32 %v1780, %v1910
  %v1958 = vadd.f32 %v1781, %v1939
  %v1959 = vadd.f32 %v1782, %v1912
  %v1960 = vadd.f32 %v1783, %v1941
  %v1961 = vadd.f32 %v1784, %v1915
  %v1962 = vadd.f32 %v1785, %v1944
  %v1963 = vadd.f32 %v1786, %v1917
  %v1964 = vadd.f32 %v1787, %v1946
  %v1965 = vadd.f32 %v1788, %v1920
  %v1966 = vadd.f32 %v1789, %v1949
  %v1967 = vadd.f32 %v1790, %v1922
  %v1968 = vadd.f32 %v1791, %v1951
  %s1969 = scalar_lea.vmem %s3, 512
  %v1970 = vld [vmem:[%s1969] sm:$0xff]
  %v1971 = vld [vmem:[%s1969 + $0x8] sm:$0xff]
  %v1972 = vld [vmem:[%s1969 + $0x10] sm:$0xff]
  %v1973 = vld [vmem:[%s1969 + $0x18] sm:$0xff]
  %v1974 = vld [vmem:[%s1969 + $0x20] sm:$0xff]
  %v1975 = vld [vmem:[%s1969 + $0x28] sm:$0xff]
  %v1976 = vld [vmem:[%s1969 + $0x30] sm:$0xff]
  %v1977 = vld [vmem:[%s1969 + $0x38] sm:$0xff]
  %v1978 = vld [vmem:[%s1969 + $0x40] sm:$0xff]
  %v1979 = vld [vmem:[%s1969 + $0x48] sm:$0xff]
  %v1980 = vld [vmem:[%s1969 + $0x50] sm:$0xff]
  %v1981 = vld [vmem:[%s1969 + $0x58] sm:$0xff]
  %v1982 = vld [vmem:[%s1969 + $0x60] sm:$0xff]
  %v1983 = vld [vmem:[%s1969 + $0x68] sm:$0xff]
  %v1984 = vld [vmem:[%s1969 + $0x70] sm:$0xff]
  %v1985 = vld [vmem:[%s1969 + $0x78] sm:$0xff]
  %v1988 = vunpack.c.l.b16 %v702
  %v1989 = vunpack.c.l.b16 %v703
  %v1990 = vpack.c.b16 %v1989, %v1988
  %v2008 = vunpack.c.l.b16 %v1970
  %v2009 = vunpack.c.h.b16 %v1970
  %v2010 = vunpack.c.l.b16 %v1971
  %v2011 = vunpack.c.h.b16 %v1971
  %v2012 = vunpack.c.l.b16 %v1972
  %v2013 = vunpack.c.h.b16 %v1972
  %v2014 = vunpack.c.l.b16 %v1973
  %v2015 = vunpack.c.h.b16 %v1973
  %v2016 = vunpack.c.l.b16 %v1974
  %v2017 = vunpack.c.h.b16 %v1974
  %v2018 = vunpack.c.l.b16 %v1975
  %v2019 = vunpack.c.h.b16 %v1975
  %v2020 = vunpack.c.l.b16 %v1976
  %v2021 = vunpack.c.h.b16 %v1976
  %v2022 = vunpack.c.l.b16 %v1977
  %v2023 = vunpack.c.h.b16 %v1977
  %v2024 = vunpack.c.l.b16 %v1978
  %v2025 = vunpack.c.h.b16 %v1978
  %v2026 = vunpack.c.l.b16 %v1979
  %v2027 = vunpack.c.h.b16 %v1979
  %v2028 = vunpack.c.l.b16 %v1980
  %v2029 = vunpack.c.h.b16 %v1980
  %v2030 = vunpack.c.l.b16 %v1981
  %v2031 = vunpack.c.h.b16 %v1981
  %v2032 = vunpack.c.l.b16 %v1982
  %v2033 = vunpack.c.h.b16 %v1982
  %v2034 = vunpack.c.l.b16 %v1983
  %v2035 = vunpack.c.h.b16 %v1983
  %v2036 = vunpack.c.l.b16 %v1984
  %v2037 = vunpack.c.h.b16 %v1984
  %v2038 = vunpack.c.l.b16 %v1985
  %v2039 = vunpack.c.h.b16 %v1985
  %v2040 = vpack.c.b16 %v2010, %v2008
  %v2041 = vpack.c.b16 %v2011, %v2009
  %v2042 = vpack.c.b16 %v2014, %v2012
  %v2043 = vpack.c.b16 %v2015, %v2013
  %v2044 = vpack.c.b16 %v2018, %v2016
  %v2045 = vpack.c.b16 %v2019, %v2017
  %v2046 = vpack.c.b16 %v2022, %v2020
  %v2047 = vpack.c.b16 %v2023, %v2021
  %v2048 = vpack.c.b16 %v2026, %v2024
  %v2049 = vpack.c.b16 %v2027, %v2025
  %v2050 = vpack.c.b16 %v2030, %v2028
  %v2051 = vpack.c.b16 %v2031, %v2029
  %v2052 = vpack.c.b16 %v2034, %v2032
  %v2053 = vpack.c.b16 %v2035, %v2033
  %v2054 = vpack.c.b16 %v2038, %v2036
  %v2055 = vpack.c.b16 %v2039, %v2037
  %2072 = vmatpush.bf16.msra.mxu0 %v2054
  %2073 = vmatpush.bf16.msra.mxu0 %v2052
  %2074 = vmatpush.bf16.msra.mxu0 %v2050
  %2075 = vmatpush.bf16.msra.mxu0 %v2048
  %2076 = vmatpush.bf16.msra.mxu0 %v2046
  %2077 = vmatpush.bf16.msra.mxu0 %v2044
  %2078 = vmatpush.bf16.msra.mxu0 %v2042
  %2079 = vmatpush.bf16.msra.mxu0 %v2040
  %2080 = vmatmul.bf16.gmra.mxu0 %v1471
  %v2081 = vpop.f32.mrf.mxu0
  %v2082 = vadd.f32 0.0, %v2081
  %v2083 = vpop.f32.mrf.mxu0
  %v2084 = vadd.f32 0.0, %v2083
  %2085 = vmatmul.bf16.gmra.mxu0 %v1472
  %v2086 = vpop.f32.mrf.mxu0
  %v2087 = vadd.f32 0.0, %v2086
  %v2088 = vpop.f32.mrf.mxu0
  %v2089 = vadd.f32 0.0, %v2088
  %2090 = vmatmul.bf16.gmra.mxu0 %v1636
  %v2091 = vpop.f32.mrf.mxu0
  %v2092 = vadd.f32 0.0, %v2091
  %v2093 = vpop.f32.mrf.mxu0
  %v2094 = vadd.f32 0.0, %v2093
  %2095 = vmatmul.bf16.gmra.mxu0 %v1990
  %v2096 = vpop.f32.mrf.mxu0
  %v2097 = vadd.f32 0.0, %v2096
  %v2098 = vpop.f32.mrf.mxu0
  %v2099 = vadd.f32 0.0, %v2098
  %2100 = vdwg.mxu0
  %2101 = vmatpush.bf16.msra.mxu0 %v2055
  %2102 = vmatpush.bf16.msra.mxu0 %v2053
  %2103 = vmatpush.bf16.msra.mxu0 %v2051
  %2104 = vmatpush.bf16.msra.mxu0 %v2049
  %2105 = vmatpush.bf16.msra.mxu0 %v2047
  %2106 = vmatpush.bf16.msra.mxu0 %v2045
  %2107 = vmatpush.bf16.msra.mxu0 %v2043
  %2108 = vmatpush.bf16.msra.mxu0 %v2041
  %2109 = vmatmul.bf16.gmra.mxu0 %v1471
  %v2110 = vpop.f32.mrf.mxu0
  %v2111 = vadd.f32 0.0, %v2110
  %v2112 = vpop.f32.mrf.mxu0
  %v2113 = vadd.f32 0.0, %v2112
  %2114 = vmatmul.bf16.gmra.mxu0 %v1472
  %v2115 = vpop.f32.mrf.mxu0
  %v2116 = vadd.f32 0.0, %v2115
  %v2117 = vpop.f32.mrf.mxu0
  %v2118 = vadd.f32 0.0, %v2117
  %2119 = vmatmul.bf16.gmra.mxu0 %v1636
  %v2120 = vpop.f32.mrf.mxu0
  %v2121 = vadd.f32 0.0, %v2120
  %v2122 = vpop.f32.mrf.mxu0
  %v2123 = vadd.f32 0.0, %v2122
  %2124 = vmatmul.bf16.gmra.mxu0 %v1990
  %v2125 = vpop.f32.mrf.mxu0
  %v2126 = vadd.f32 0.0, %v2125
  %v2127 = vpop.f32.mrf.mxu0
  %v2128 = vadd.f32 0.0, %v2127
  %2129 = vdwg.mxu0
  %v2130 = vadd.f32 %v1953, %v2082
  %v2131 = vadd.f32 %v1954, %v2111
  %v2132 = vadd.f32 %v1955, %v2084
  %v2133 = vadd.f32 %v1956, %v2113
  %v2134 = vadd.f32 %v1957, %v2087
  %v2135 = vadd.f32 %v1958, %v2116
  %v2136 = vadd.f32 %v1959, %v2089
  %v2137 = vadd.f32 %v1960, %v2118
  %v2138 = vadd.f32 %v1961, %v2092
  %v2139 = vadd.f32 %v1962, %v2121
  %v2140 = vadd.f32 %v1963, %v2094
  %v2141 = vadd.f32 %v1964, %v2123
  %v2142 = vadd.f32 %v1965, %v2097
  %v2143 = vadd.f32 %v1966, %v2126
  %v2144 = vadd.f32 %v1967, %v2099
  %v2145 = vadd.f32 %v1968, %v2128
  %2146 = vmatpush.bf16.msra.mxu0 %v1377
  %2147 = vmatpush.bf16.msra.mxu0 %v1375
  %2148 = vmatpush.bf16.msra.mxu0 %v1373
  %2149 = vmatpush.bf16.msra.mxu0 %v1371
  %2150 = vmatpush.bf16.msra.mxu0 %v1369
  %2151 = vmatpush.bf16.msra.mxu0 %v1367
  %2152 = vmatpush.bf16.msra.mxu0 %v1365
  %2153 = vmatpush.bf16.msra.mxu0 %v1363
  %2154 = vmatmul.bf16.gmra.mxu0 %v1470
  %v2155 = vpop.f32.mrf.mxu0
  %v2156 = vadd.f32 0.0, %v2155
  %v2157 = vpop.f32.mrf.mxu0
  %v2158 = vadd.f32 0.0, %v2157
  %2159 = vmatmul.bf16.gmra.mxu0 %v1471
  %v2160 = vpop.f32.mrf.mxu0
  %v2161 = vadd.f32 0.0, %v2160
  %v2162 = vpop.f32.mrf.mxu0
  %v2163 = vadd.f32 0.0, %v2162
  %2164 = vmatmul.bf16.gmra.mxu0 %v1472
  %v2165 = vpop.f32.mrf.mxu0
  %v2166 = vadd.f32 0.0, %v2165
  %v2167 = vpop.f32.mrf.mxu0
  %v2168 = vadd.f32 0.0, %v2167
  %2169 = vmatmul.bf16.gmra.mxu0 %v1636
  %v2170 = vpop.f32.mrf.mxu0
  %v2171 = vadd.f32 0.0, %v2170
  %v2172 = vpop.f32.mrf.mxu0
  %v2173 = vadd.f32 0.0, %v2172
  %2174 = vdwg.mxu0
  %2175 = vmatpush.bf16.msra.mxu0 %v1378
  %2176 = vmatpush.bf16.msra.mxu0 %v1376
  %2177 = vmatpush.bf16.msra.mxu0 %v1374
  %2178 = vmatpush.bf16.msra.mxu0 %v1372
  %2179 = vmatpush.bf16.msra.mxu0 %v1370
  %2180 = vmatpush.bf16.msra.mxu0 %v1368
  %2181 = vmatpush.bf16.msra.mxu0 %v1366
  %2182 = vmatpush.bf16.msra.mxu0 %v1364
  %2183 = vmatmul.bf16.gmra.mxu0 %v1470
  %v2184 = vpop.f32.mrf.mxu0
  %v2185 = vadd.f32 0.0, %v2184
  %v2186 = vpop.f32.mrf.mxu0
  %v2187 = vadd.f32 0.0, %v2186
  %2188 = vmatmul.bf16.gmra.mxu0 %v1471
  %v2189 = vpop.f32.mrf.mxu0
  %v2190 = vadd.f32 0.0, %v2189
  %v2191 = vpop.f32.mrf.mxu0
  %v2192 = vadd.f32 0.0, %v2191
  %2193 = vmatmul.bf16.gmra.mxu0 %v1472
  %v2194 = vpop.f32.mrf.mxu0
  %v2195 = vadd.f32 0.0, %v2194
  %v2196 = vpop.f32.mrf.mxu0
  %v2197 = vadd.f32 0.0, %v2196
  %2198 = vmatmul.bf16.gmra.mxu0 %v1636
  %v2199 = vpop.f32.mrf.mxu0
  %v2200 = vadd.f32 0.0, %v2199
  %v2201 = vpop.f32.mrf.mxu0
  %v2202 = vadd.f32 0.0, %v2201
  %2203 = vdwg.mxu0
  %2204 = vmatpush.bf16.msra.mxu0 %v1539
  %2205 = vmatpush.bf16.msra.mxu0 %v1537
  %2206 = vmatpush.bf16.msra.mxu0 %v1535
  %2207 = vmatpush.bf16.msra.mxu0 %v1533
  %2208 = vmatpush.bf16.msra.mxu0 %v1531
  %2209 = vmatpush.bf16.msra.mxu0 %v1529
  %2210 = vmatpush.bf16.msra.mxu0 %v1527
  %2211 = vmatpush.bf16.msra.mxu0 %v1525
  %2212 = vmatmul.bf16.gmra.mxu0 %v1307
  %v2213 = vpop.f32.mrf.mxu0
  %v2214 = vadd.f32 %v2156, %v2213
  %v2215 = vpop.f32.mrf.mxu0
  %v2216 = vadd.f32 %v2158, %v2215
  %2217 = vmatmul.bf16.gmra.mxu0 %v1308
  %v2218 = vpop.f32.mrf.mxu0
  %v2219 = vadd.f32 %v2161, %v2218
  %v2220 = vpop.f32.mrf.mxu0
  %v2221 = vadd.f32 %v2163, %v2220
  %2222 = vmatmul.bf16.gmra.mxu0 %v1309
  %v2223 = vpop.f32.mrf.mxu0
  %v2224 = vadd.f32 %v2166, %v2223
  %v2225 = vpop.f32.mrf.mxu0
  %v2226 = vadd.f32 %v2168, %v2225
  %2227 = vmatmul.bf16.gmra.mxu0 %v1310
  %v2228 = vpop.f32.mrf.mxu0
  %v2229 = vadd.f32 %v2171, %v2228
  %v2230 = vpop.f32.mrf.mxu0
  %v2231 = vadd.f32 %v2173, %v2230
  %2232 = vdwg.mxu0
  %2233 = vmatpush.bf16.msra.mxu0 %v1540
  %2234 = vmatpush.bf16.msra.mxu0 %v1538
  %2235 = vmatpush.bf16.msra.mxu0 %v1536
  %2236 = vmatpush.bf16.msra.mxu0 %v1534
  %2237 = vmatpush.bf16.msra.mxu0 %v1532
  %2238 = vmatpush.bf16.msra.mxu0 %v1530
  %2239 = vmatpush.bf16.msra.mxu0 %v1528
  %2240 = vmatpush.bf16.msra.mxu0 %v1526
  %2241 = vmatmul.bf16.gmra.mxu0 %v1307
  %v2242 = vpop.f32.mrf.mxu0
  %v2243 = vadd.f32 %v2185, %v2242
  %v2244 = vpop.f32.mrf.mxu0
  %v2245 = vadd.f32 %v2187, %v2244
  %2246 = vmatmul.bf16.gmra.mxu0 %v1308
  %v2247 = vpop.f32.mrf.mxu0
  %v2248 = vadd.f32 %v2190, %v2247
  %v2249 = vpop.f32.mrf.mxu0
  %v2250 = vadd.f32 %v2192, %v2249
  %2251 = vmatmul.bf16.gmra.mxu0 %v1309
  %v2252 = vpop.f32.mrf.mxu0
  %v2253 = vadd.f32 %v2195, %v2252
  %v2254 = vpop.f32.mrf.mxu0
  %v2255 = vadd.f32 %v2197, %v2254
  %2256 = vmatmul.bf16.gmra.mxu0 %v1310
  %v2257 = vpop.f32.mrf.mxu0
  %v2258 = vadd.f32 %v2200, %v2257
  %v2259 = vpop.f32.mrf.mxu0
  %v2260 = vadd.f32 %v2202, %v2259
  %2261 = vdwg.mxu0
  %2262 = vmatpush.bf16.msra.mxu0 %v1700
  %2263 = vmatpush.bf16.msra.mxu0 %v1698
  %2264 = vmatpush.bf16.msra.mxu0 %v1696
  %2265 = vmatpush.bf16.msra.mxu0 %v1694
  %2266 = vmatpush.bf16.msra.mxu0 %v1692
  %2267 = vmatpush.bf16.msra.mxu0 %v1690
  %2268 = vmatpush.bf16.msra.mxu0 %v1688
  %2269 = vmatpush.bf16.msra.mxu0 %v1686
  %2270 = vmatmul.bf16.gmra.mxu0 %v1308
  %v2271 = vpop.f32.mrf.mxu0
  %v2272 = vadd.f32 0.0, %v2271
  %v2273 = vpop.f32.mrf.mxu0
  %v2274 = vadd.f32 0.0, %v2273
  %2275 = vmatmul.bf16.gmra.mxu0 %v1309
  %v2276 = vpop.f32.mrf.mxu0
  %v2277 = vadd.f32 0.0, %v2276
  %v2278 = vpop.f32.mrf.mxu0
  %v2279 = vadd.f32 0.0, %v2278
  %2280 = vmatmul.bf16.gmra.mxu0 %v1310
  %v2281 = vpop.f32.mrf.mxu0
  %v2282 = vadd.f32 0.0, %v2281
  %v2283 = vpop.f32.mrf.mxu0
  %v2284 = vadd.f32 0.0, %v2283
  %2285 = vmatmul.bf16.gmra.mxu0 %v1813
  %v2286 = vpop.f32.mrf.mxu0
  %v2287 = vadd.f32 0.0, %v2286
  %v2288 = vpop.f32.mrf.mxu0
  %v2289 = vadd.f32 0.0, %v2288
  %2290 = vdwg.mxu0
  %2291 = vmatpush.bf16.msra.mxu0 %v1701
  %2292 = vmatpush.bf16.msra.mxu0 %v1699
  %2293 = vmatpush.bf16.msra.mxu0 %v1697
  %2294 = vmatpush.bf16.msra.mxu0 %v1695
  %2295 = vmatpush.bf16.msra.mxu0 %v1693
  %2296 = vmatpush.bf16.msra.mxu0 %v1691
  %2297 = vmatpush.bf16.msra.mxu0 %v1689
  %2298 = vmatpush.bf16.msra.mxu0 %v1687
  %2299 = vmatmul.bf16.gmra.mxu0 %v1308
  %v2300 = vpop.f32.mrf.mxu0
  %v2301 = vadd.f32 0.0, %v2300
  %v2302 = vpop.f32.mrf.mxu0
  %v2303 = vadd.f32 0.0, %v2302
  %2304 = vmatmul.bf16.gmra.mxu0 %v1309
  %v2305 = vpop.f32.mrf.mxu0
  %v2306 = vadd.f32 0.0, %v2305
  %v2307 = vpop.f32.mrf.mxu0
  %v2308 = vadd.f32 0.0, %v2307
  %2309 = vmatmul.bf16.gmra.mxu0 %v1310
  %v2310 = vpop.f32.mrf.mxu0
  %v2311 = vadd.f32 0.0, %v2310
  %v2312 = vpop.f32.mrf.mxu0
  %v2313 = vadd.f32 0.0, %v2312
  %2314 = vmatmul.bf16.gmra.mxu0 %v1813
  %v2315 = vpop.f32.mrf.mxu0
  %v2316 = vadd.f32 0.0, %v2315
  %v2317 = vpop.f32.mrf.mxu0
  %v2318 = vadd.f32 0.0, %v2317
  %2319 = vdwg.mxu0
  %v2320 = vadd.f32 %v2214, %v2272
  %v2321 = vadd.f32 %v2243, %v2301
  %v2322 = vadd.f32 %v2216, %v2274
  %v2323 = vadd.f32 %v2245, %v2303
  %v2324 = vadd.f32 %v2219, %v2277
  %v2325 = vadd.f32 %v2248, %v2306
  %v2326 = vadd.f32 %v2221, %v2279
  %v2327 = vadd.f32 %v2250, %v2308
  %v2328 = vadd.f32 %v2224, %v2282
  %v2329 = vadd.f32 %v2253, %v2311
  %v2330 = vadd.f32 %v2226, %v2284
  %v2331 = vadd.f32 %v2255, %v2313
  %v2332 = vadd.f32 %v2229, %v2287
  %v2333 = vadd.f32 %v2258, %v2316
  %v2334 = vadd.f32 %v2231, %v2289
  %v2335 = vadd.f32 %v2260, %v2318
  %2336 = vmatpush.bf16.msra.mxu0 %v1877
  %2337 = vmatpush.bf16.msra.mxu0 %v1875
  %2338 = vmatpush.bf16.msra.mxu0 %v1873
  %2339 = vmatpush.bf16.msra.mxu0 %v1871
  %2340 = vmatpush.bf16.msra.mxu0 %v1869
  %2341 = vmatpush.bf16.msra.mxu0 %v1867
  %2342 = vmatpush.bf16.msra.mxu0 %v1865
  %2343 = vmatpush.bf16.msra.mxu0 %v1863
  %2344 = vmatmul.bf16.gmra.mxu0 %v1471
  %v2345 = vpop.f32.mrf.mxu0
  %v2346 = vadd.f32 0.0, %v2345
  %v2347 = vpop.f32.mrf.mxu0
  %v2348 = vadd.f32 0.0, %v2347
  %2349 = vmatmul.bf16.gmra.mxu0 %v1472
  %v2350 = vpop.f32.mrf.mxu0
  %v2351 = vadd.f32 0.0, %v2350
  %v2352 = vpop.f32.mrf.mxu0
  %v2353 = vadd.f32 0.0, %v2352
  %2354 = vmatmul.bf16.gmra.mxu0 %v1636
  %v2355 = vpop.f32.mrf.mxu0
  %v2356 = vadd.f32 0.0, %v2355
  %v2357 = vpop.f32.mrf.mxu0
  %v2358 = vadd.f32 0.0, %v2357
  %2359 = vmatmul.bf16.gmra.mxu0 %v1990
  %v2360 = vpop.f32.mrf.mxu0
  %v2361 = vadd.f32 0.0, %v2360
  %v2362 = vpop.f32.mrf.mxu0
  %v2363 = vadd.f32 0.0, %v2362
  %2364 = vdwg.mxu0
  %2365 = vmatpush.bf16.msra.mxu0 %v1878
  %2366 = vmatpush.bf16.msra.mxu0 %v1876
  %2367 = vmatpush.bf16.msra.mxu0 %v1874
  %2368 = vmatpush.bf16.msra.mxu0 %v1872
  %2369 = vmatpush.bf16.msra.mxu0 %v1870
  %2370 = vmatpush.bf16.msra.mxu0 %v1868
  %2371 = vmatpush.bf16.msra.mxu0 %v1866
  %2372 = vmatpush.bf16.msra.mxu0 %v1864
  %2373 = vmatmul.bf16.gmra.mxu0 %v1471
  %v2374 = vpop.f32.mrf.mxu0
  %v2375 = vadd.f32 0.0, %v2374
  %v2376 = vpop.f32.mrf.mxu0
  %v2377 = vadd.f32 0.0, %v2376
  %2378 = vmatmul.bf16.gmra.mxu0 %v1472
  %v2379 = vpop.f32.mrf.mxu0
  %v2380 = vadd.f32 0.0, %v2379
  %v2381 = vpop.f32.mrf.mxu0
  %v2382 = vadd.f32 0.0, %v2381
  %2383 = vmatmul.bf16.gmra.mxu0 %v1636
  %v2384 = vpop.f32.mrf.mxu0
  %v2385 = vadd.f32 0.0, %v2384
  %v2386 = vpop.f32.mrf.mxu0
  %v2387 = vadd.f32 0.0, %v2386
  %2388 = vmatmul.bf16.gmra.mxu0 %v1990
  %v2389 = vpop.f32.mrf.mxu0
  %v2390 = vadd.f32 0.0, %v2389
  %v2391 = vpop.f32.mrf.mxu0
  %v2392 = vadd.f32 0.0, %v2391
  %2393 = vdwg.mxu0
  %v2394 = vadd.f32 %v2320, %v2346
  %v2395 = vadd.f32 %v2321, %v2375
  %v2396 = vadd.f32 %v2322, %v2348
  %v2397 = vadd.f32 %v2323, %v2377
  %v2398 = vadd.f32 %v2324, %v2351
  %v2399 = vadd.f32 %v2325, %v2380
  %v2400 = vadd.f32 %v2326, %v2353
  %v2401 = vadd.f32 %v2327, %v2382
  %v2402 = vadd.f32 %v2328, %v2356
  %v2403 = vadd.f32 %v2329, %v2385
  %v2404 = vadd.f32 %v2330, %v2358
  %v2405 = vadd.f32 %v2331, %v2387
  %v2406 = vadd.f32 %v2332, %v2361
  %v2407 = vadd.f32 %v2333, %v2390
  %v2408 = vadd.f32 %v2334, %v2363
  %v2409 = vadd.f32 %v2335, %v2392
  %v2412 = vunpack.c.l.b16 %v1256
  %v2413 = vunpack.c.l.b16 %v1257
  %v2414 = vpack.c.b16 %v2413, %v2412
  %2416 = vmatpush.bf16.msra.mxu0 %v2054
  %2417 = vmatpush.bf16.msra.mxu0 %v2052
  %2418 = vmatpush.bf16.msra.mxu0 %v2050
  %2419 = vmatpush.bf16.msra.mxu0 %v2048
  %2420 = vmatpush.bf16.msra.mxu0 %v2046
  %2421 = vmatpush.bf16.msra.mxu0 %v2044
  %2422 = vmatpush.bf16.msra.mxu0 %v2042
  %2423 = vmatpush.bf16.msra.mxu0 %v2040
  %2424 = vmatmul.bf16.gmra.mxu0 %v1309
  %v2425 = vpop.f32.mrf.mxu0
  %v2426 = vadd.f32 0.0, %v2425
  %v2427 = vpop.f32.mrf.mxu0
  %v2428 = vadd.f32 0.0, %v2427
  %2429 = vmatmul.bf16.gmra.mxu0 %v1310
  %v2430 = vpop.f32.mrf.mxu0
  %v2431 = vadd.f32 0.0, %v2430
  %v2432 = vpop.f32.mrf.mxu0
  %v2433 = vadd.f32 0.0, %v2432
  %2434 = vmatmul.bf16.gmra.mxu0 %v1813
  %v2435 = vpop.f32.mrf.mxu0
  %v2436 = vadd.f32 0.0, %v2435
  %v2437 = vpop.f32.mrf.mxu0
  %v2438 = vadd.f32 0.0, %v2437
  %2439 = vmatmul.bf16.gmra.mxu0 %v2414
  %v2440 = vpop.f32.mrf.mxu0
  %v2441 = vadd.f32 0.0, %v2440
  %v2442 = vpop.f32.mrf.mxu0
  %v2443 = vadd.f32 0.0, %v2442
  %2444 = vdwg.mxu0
  %2445 = vmatpush.bf16.msra.mxu0 %v2055
  %2446 = vmatpush.bf16.msra.mxu0 %v2053
  %2447 = vmatpush.bf16.msra.mxu0 %v2051
  %2448 = vmatpush.bf16.msra.mxu0 %v2049
  %2449 = vmatpush.bf16.msra.mxu0 %v2047
  %2450 = vmatpush.bf16.msra.mxu0 %v2045
  %2451 = vmatpush.bf16.msra.mxu0 %v2043
  %2452 = vmatpush.bf16.msra.mxu0 %v2041
  %2453 = vmatmul.bf16.gmra.mxu0 %v1309
  %v2454 = vpop.f32.mrf.mxu0
  %v2455 = vadd.f32 0.0, %v2454
  %v2456 = vpop.f32.mrf.mxu0
  %v2457 = vadd.f32 0.0, %v2456
  %2458 = vmatmul.bf16.gmra.mxu0 %v1310
  %v2459 = vpop.f32.mrf.mxu0
  %v2460 = vadd.f32 0.0, %v2459
  %v2461 = vpop.f32.mrf.mxu0
  %v2462 = vadd.f32 0.0, %v2461
  %2463 = vmatmul.bf16.gmra.mxu0 %v1813
  %v2464 = vpop.f32.mrf.mxu0
  %v2465 = vadd.f32 0.0, %v2464
  %v2466 = vpop.f32.mrf.mxu0
  %v2467 = vadd.f32 0.0, %v2466
  %2468 = vmatmul.bf16.gmra.mxu0 %v2414
  %v2469 = vpop.f32.mrf.mxu0
  %v2470 = vadd.f32 0.0, %v2469
  %v2471 = vpop.f32.mrf.mxu0
  %v2472 = vadd.f32 0.0, %v2471
  %2473 = vdwg.mxu0
  %v2474 = vadd.f32 %v2394, %v2426
  %v2475 = vadd.f32 %v2395, %v2455
  %v2476 = vadd.f32 %v2396, %v2428
  %v2477 = vadd.f32 %v2397, %v2457
  %v2478 = vadd.f32 %v2398, %v2431
  %v2479 = vadd.f32 %v2399, %v2460
  %v2480 = vadd.f32 %v2400, %v2433
  %v2481 = vadd.f32 %v2401, %v2462
  %v2482 = vadd.f32 %v2402, %v2436
  %v2483 = vadd.f32 %v2403, %v2465
  %v2484 = vadd.f32 %v2404, %v2438
  %v2485 = vadd.f32 %v2405, %v2467
  %v2486 = vadd.f32 %v2406, %v2441
  %v2487 = vadd.f32 %v2407, %v2470
  %v2488 = vadd.f32 %v2408, %v2443
  %v2489 = vadd.f32 %v2409, %v2472
  %v2490 = vmax.f32 %v2130, %v2474
  %v2491 = vmax.f32 %v2131, %v2475
  %v2492 = vmax.f32 %v2132, %v2476
  %v2493 = vmax.f32 %v2133, %v2477
  %v2494 = vmax.f32 %v2134, %v2478
  %v2495 = vmax.f32 %v2135, %v2479
  %v2496 = vmax.f32 %v2136, %v2480
  %v2497 = vmax.f32 %v2137, %v2481
  %v2498 = vmax.f32 %v2138, %v2482
  %v2499 = vmax.f32 %v2139, %v2483
  %v2500 = vmax.f32 %v2140, %v2484
  %v2501 = vmax.f32 %v2141, %v2485
  %v2502 = vmax.f32 %v2142, %v2486
  %v2503 = vmax.f32 %v2143, %v2487
  %v2504 = vmax.f32 %v2144, %v2488
  %v2505 = vmax.f32 %v2145, %v2489
  %v2506 = vmax.f32 %v2490, %v2491
  %v2507 = vmax.f32 %v2492, %v2493
  %v2508 = vmax.f32 %v2494, %v2495
  %v2509 = vmax.f32 %v2496, %v2497
  %v2510 = vmax.f32 %v2498, %v2499
  %v2511 = vmax.f32 %v2500, %v2501
  %v2512 = vmax.f32 %v2502, %v2503
  %v2513 = vmax.f32 %v2504, %v2505
  %v2514 = vld [vmem:[%s4] sm:$0x1]
  %v2516 = vperm.slane %v2514, 0
  %v2518 = vadd.f32 %v2506, %v2516
  %v2519 = vadd.f32 %v2507, %v2516
  %v2520 = vadd.f32 %v2508, %v2516
  %v2521 = vadd.f32 %v2509, %v2516
  %v2522 = vadd.f32 %v2510, %v2516
  %v2523 = vadd.f32 %v2511, %v2516
  %v2524 = vadd.f32 %v2512, %v2516
  %v2525 = vadd.f32 %v2513, %v2516
  %v2526 = vmax.f32 %v2518, 0.0
  %v2527 = vmax.f32 %v2519, 0.0
  %v2528 = vmax.f32 %v2520, 0.0
  %v2529 = vmax.f32 %v2521, 0.0
  %v2530 = vmax.f32 %v2522, 0.0
  %v2531 = vmax.f32 %v2523, 0.0
  %v2532 = vmax.f32 %v2524, 0.0
  %v2533 = vmax.f32 %v2525, 0.0
  %v2534 = vpack.c.bf16 %v2526, %v2526
  %v2535 = vpack.c.bf16 %v2527, %v2527
  %v2536 = vpack.c.bf16 %v2528, %v2528
  %v2537 = vpack.c.bf16 %v2529, %v2529
  %v2538 = vpack.c.bf16 %v2530, %v2530
  %v2539 = vpack.c.bf16 %v2531, %v2531
  %v2540 = vpack.c.bf16 %v2532, %v2532
  %v2541 = vpack.c.bf16 %v2533, %v2533
  %v2542 = vld [vmem:[%s5] sm:$0xf]
  %v2543 = vld [vmem:[%s5 + $0x4] sm:$0xf]
  %v2544 = vld [vmem:[%s5 + $0x8] sm:$0xf]
  %v2545 = vld [vmem:[%s5 + $0xc] sm:$0xf]
  %v2546 = vld [vmem:[%s5 + $0x10] sm:$0xf]
  %v2547 = vld [vmem:[%s5 + $0x14] sm:$0xf]
  %v2548 = vld [vmem:[%s5 + $0x18] sm:$0xf]
  %v2549 = vld [vmem:[%s5 + $0x1c] sm:$0xf]
  %v2550 = vld [vmem:[%s5 + $0x20] sm:$0xf]
  %v2551 = vld [vmem:[%s5 + $0x24] sm:$0xf]
  %v2552 = vld [vmem:[%s5 + $0x28] sm:$0xf]
  %v2553 = vld [vmem:[%s5 + $0x2c] sm:$0xf]
  %v2554 = vld [vmem:[%s5 + $0x30] sm:$0xf]
  %v2555 = vld [vmem:[%s5 + $0x34] sm:$0xf]
  %v2556 = vld [vmem:[%s5 + $0x38] sm:$0xf]
  %v2557 = vld [vmem:[%s5 + $0x3c] sm:$0xf]
  %s2558 = scalar_lea.vmem %s5, 64
  %v2559 = vld [vmem:[%s2558] sm:$0xf]
  %v2560 = vld [vmem:[%s2558 + $0x4] sm:$0xf]
  %v2561 = vld [vmem:[%s2558 + $0x8] sm:$0xf]
  %v2562 = vld [vmem:[%s2558 + $0xc] sm:$0xf]
  %v2563 = vld [vmem:[%s2558 + $0x10] sm:$0xf]
  %v2564 = vld [vmem:[%s2558 + $0x14] sm:$0xf]
  %v2565 = vld [vmem:[%s2558 + $0x18] sm:$0xf]
  %v2566 = vld [vmem:[%s2558 + $0x1c] sm:$0xf]
  %v2567 = vld [vmem:[%s2558 + $0x20] sm:$0xf]
  %v2568 = vld [vmem:[%s2558 + $0x24] sm:$0xf]
  %v2569 = vld [vmem:[%s2558 + $0x28] sm:$0xf]
  %v2570 = vld [vmem:[%s2558 + $0x2c] sm:$0xf]
  %v2571 = vld [vmem:[%s2558 + $0x30] sm:$0xf]
  %v2572 = vld [vmem:[%s2558 + $0x34] sm:$0xf]
  %v2573 = vld [vmem:[%s2558 + $0x38] sm:$0xf]
  %v2574 = vld [vmem:[%s2558 + $0x3c] sm:$0xf]
  %v2577 = vunpack.c.l.b16 %v2536
  %v2578 = vunpack.c.l.b16 %v2537
  %v2579 = vpack.c.b16 %v2578, %v2577
  %v2597 = vunpack.c.l.b16 %v2559
  %v2598 = vunpack.c.l.b16 %v2560
  %v2599 = vunpack.c.l.b16 %v2561
  %v2600 = vunpack.c.l.b16 %v2562
  %v2601 = vunpack.c.l.b16 %v2563
  %v2602 = vunpack.c.l.b16 %v2564
  %v2603 = vunpack.c.l.b16 %v2565
  %v2604 = vunpack.c.l.b16 %v2566
  %v2605 = vunpack.c.l.b16 %v2567
  %v2606 = vunpack.c.l.b16 %v2568
  %v2607 = vunpack.c.l.b16 %v2569
  %v2608 = vunpack.c.l.b16 %v2570
  %v2609 = vunpack.c.l.b16 %v2571
  %v2610 = vunpack.c.l.b16 %v2572
  %v2611 = vunpack.c.l.b16 %v2573
  %v2612 = vunpack.c.l.b16 %v2574
  %v2613 = vpack.c.b16 %v2598, %v2597
  %v2614 = vpack.c.b16 %v2600, %v2599
  %v2615 = vpack.c.b16 %v2602, %v2601
  %v2616 = vpack.c.b16 %v2604, %v2603
  %v2617 = vpack.c.b16 %v2606, %v2605
  %v2618 = vpack.c.b16 %v2608, %v2607
  %v2619 = vpack.c.b16 %v2610, %v2609
  %v2620 = vpack.c.b16 %v2612, %v2611
  %2629 = vmatpush.bf16.msra.mxu0 %v2620
  %2630 = vmatpush.bf16.msra.mxu0 %v2619
  %2631 = vmatpush.bf16.msra.mxu0 %v2618
  %2632 = vmatpush.bf16.msra.mxu0 %v2617
  %2633 = vmatpush.bf16.msra.mxu0 %v2616
  %2634 = vmatpush.bf16.msra.mxu0 %v2615
  %2635 = vmatpush.bf16.msra.mxu0 %v2614
  %2636 = vmatpush.bf16.msra.mxu0 %v2613
  %2637 = vmatmul.bf16.gmra.mxu0 %v2579
  %v2638 = vpop.f32.mrf.mxu0
  %v2639 = vadd.f32 0.0, %v2638
  %v2640 = vpop.f32.mrf.mxu0
  %v2641 = vadd.f32 0.0, %v2640
  %2642 = vdwg.mxu0
  %v2645 = vunpack.c.l.b16 %v2534
  %v2646 = vunpack.c.l.b16 %v2535
  %v2647 = vpack.c.b16 %v2646, %v2645
  %v2665 = vunpack.c.l.b16 %v2542
  %v2666 = vunpack.c.l.b16 %v2543
  %v2667 = vunpack.c.l.b16 %v2544
  %v2668 = vunpack.c.l.b16 %v2545
  %v2669 = vunpack.c.l.b16 %v2546
  %v2670 = vunpack.c.l.b16 %v2547
  %v2671 = vunpack.c.l.b16 %v2548
  %v2672 = vunpack.c.l.b16 %v2549
  %v2673 = vunpack.c.l.b16 %v2550
  %v2674 = vunpack.c.l.b16 %v2551
  %v2675 = vunpack.c.l.b16 %v2552
  %v2676 = vunpack.c.l.b16 %v2553
  %v2677 = vunpack.c.l.b16 %v2554
  %v2678 = vunpack.c.l.b16 %v2555
  %v2679 = vunpack.c.l.b16 %v2556
  %v2680 = vunpack.c.l.b16 %v2557
  %v2681 = vpack.c.b16 %v2666, %v2665
  %v2682 = vpack.c.b16 %v2668, %v2667
  %v2683 = vpack.c.b16 %v2670, %v2669
  %v2684 = vpack.c.b16 %v2672, %v2671
  %v2685 = vpack.c.b16 %v2674, %v2673
  %v2686 = vpack.c.b16 %v2676, %v2675
  %v2687 = vpack.c.b16 %v2678, %v2677
  %v2688 = vpack.c.b16 %v2680, %v2679
  %2697 = vmatpush.bf16.msra.mxu0 %v2688
  %2698 = vmatpush.bf16.msra.mxu0 %v2687
  %2699 = vmatpush.bf16.msra.mxu0 %v2686
  %2700 = vmatpush.bf16.msra.mxu0 %v2685
  %2701 = vmatpush.bf16.msra.mxu0 %v2684
  %2702 = vmatpush.bf16.msra.mxu0 %v2683
  %2703 = vmatpush.bf16.msra.mxu0 %v2682
  %2704 = vmatpush.bf16.msra.mxu0 %v2681
  %2705 = vmatmul.bf16.gmra.mxu0 %v2647
  %v2706 = vpop.f32.mrf.mxu0
  %v2707 = vadd.f32 %v2639, %v2706
  %v2708 = vpop.f32.mrf.mxu0
  %v2709 = vadd.f32 %v2641, %v2708
  %2710 = vdwg.mxu0
  %s2711 = scalar_lea.vmem %s5, 128
  %v2712 = vld [vmem:[%s2711] sm:$0xf]
  %v2713 = vld [vmem:[%s2711 + $0x4] sm:$0xf]
  %v2714 = vld [vmem:[%s2711 + $0x8] sm:$0xf]
  %v2715 = vld [vmem:[%s2711 + $0xc] sm:$0xf]
  %v2716 = vld [vmem:[%s2711 + $0x10] sm:$0xf]
  %v2717 = vld [vmem:[%s2711 + $0x14] sm:$0xf]
  %v2718 = vld [vmem:[%s2711 + $0x18] sm:$0xf]
  %v2719 = vld [vmem:[%s2711 + $0x1c] sm:$0xf]
  %v2720 = vld [vmem:[%s2711 + $0x20] sm:$0xf]
  %v2721 = vld [vmem:[%s2711 + $0x24] sm:$0xf]
  %v2722 = vld [vmem:[%s2711 + $0x28] sm:$0xf]
  %v2723 = vld [vmem:[%s2711 + $0x2c] sm:$0xf]
  %v2724 = vld [vmem:[%s2711 + $0x30] sm:$0xf]
  %v2725 = vld [vmem:[%s2711 + $0x34] sm:$0xf]
  %v2726 = vld [vmem:[%s2711 + $0x38] sm:$0xf]
  %v2727 = vld [vmem:[%s2711 + $0x3c] sm:$0xf]
  %v2730 = vunpack.c.l.b16 %v2538
  %v2731 = vunpack.c.l.b16 %v2539
  %v2732 = vpack.c.b16 %v2731, %v2730
  %v2750 = vunpack.c.l.b16 %v2712
  %v2751 = vunpack.c.l.b16 %v2713
  %v2752 = vunpack.c.l.b16 %v2714
  %v2753 = vunpack.c.l.b16 %v2715
  %v2754 = vunpack.c.l.b16 %v2716
  %v2755 = vunpack.c.l.b16 %v2717
  %v2756 = vunpack.c.l.b16 %v2718
  %v2757 = vunpack.c.l.b16 %v2719
  %v2758 = vunpack.c.l.b16 %v2720
  %v2759 = vunpack.c.l.b16 %v2721
  %v2760 = vunpack.c.l.b16 %v2722
  %v2761 = vunpack.c.l.b16 %v2723
  %v2762 = vunpack.c.l.b16 %v2724
  %v2763 = vunpack.c.l.b16 %v2725
  %v2764 = vunpack.c.l.b16 %v2726
  %v2765 = vunpack.c.l.b16 %v2727
  %v2766 = vpack.c.b16 %v2751, %v2750
  %v2767 = vpack.c.b16 %v2753, %v2752
  %v2768 = vpack.c.b16 %v2755, %v2754
  %v2769 = vpack.c.b16 %v2757, %v2756
  %v2770 = vpack.c.b16 %v2759, %v2758
  %v2771 = vpack.c.b16 %v2761, %v2760
  %v2772 = vpack.c.b16 %v2763, %v2762
  %v2773 = vpack.c.b16 %v2765, %v2764
  %2782 = vmatpush.bf16.msra.mxu0 %v2773
  %2783 = vmatpush.bf16.msra.mxu0 %v2772
  %2784 = vmatpush.bf16.msra.mxu0 %v2771
  %2785 = vmatpush.bf16.msra.mxu0 %v2770
  %2786 = vmatpush.bf16.msra.mxu0 %v2769
  %2787 = vmatpush.bf16.msra.mxu0 %v2768
  %2788 = vmatpush.bf16.msra.mxu0 %v2767
  %2789 = vmatpush.bf16.msra.mxu0 %v2766
  %2790 = vmatmul.bf16.gmra.mxu0 %v2732
  %v2791 = vpop.f32.mrf.mxu0
  %v2792 = vadd.f32 0.0, %v2791
  %v2793 = vpop.f32.mrf.mxu0
  %v2794 = vadd.f32 0.0, %v2793
  %2795 = vdwg.mxu0
  %v2796 = vadd.f32 %v2707, %v2792
  %v2797 = vadd.f32 %v2709, %v2794
  %s2798 = scalar_lea.vmem %s5, 192
  %v2799 = vld [vmem:[%s2798] sm:$0xf]
  %v2800 = vld [vmem:[%s2798 + $0x4] sm:$0xf]
  %v2801 = vld [vmem:[%s2798 + $0x8] sm:$0xf]
  %v2802 = vld [vmem:[%s2798 + $0xc] sm:$0xf]
  %v2803 = vld [vmem:[%s2798 + $0x10] sm:$0xf]
  %v2804 = vld [vmem:[%s2798 + $0x14] sm:$0xf]
  %v2805 = vld [vmem:[%s2798 + $0x18] sm:$0xf]
  %v2806 = vld [vmem:[%s2798 + $0x1c] sm:$0xf]
  %v2807 = vld [vmem:[%s2798 + $0x20] sm:$0xf]
  %v2808 = vld [vmem:[%s2798 + $0x24] sm:$0xf]
  %v2809 = vld [vmem:[%s2798 + $0x28] sm:$0xf]
  %v2810 = vld [vmem:[%s2798 + $0x2c] sm:$0xf]
  %v2811 = vld [vmem:[%s2798 + $0x30] sm:$0xf]
  %v2812 = vld [vmem:[%s2798 + $0x34] sm:$0xf]
  %v2813 = vld [vmem:[%s2798 + $0x38] sm:$0xf]
  %v2814 = vld [vmem:[%s2798 + $0x3c] sm:$0xf]
  %v2817 = vunpack.c.l.b16 %v2540
  %v2818 = vunpack.c.l.b16 %v2541
  %v2819 = vpack.c.b16 %v2818, %v2817
  %v2837 = vunpack.c.l.b16 %v2799
  %v2838 = vunpack.c.l.b16 %v2800
  %v2839 = vunpack.c.l.b16 %v2801
  %v2840 = vunpack.c.l.b16 %v2802
  %v2841 = vunpack.c.l.b16 %v2803
  %v2842 = vunpack.c.l.b16 %v2804
  %v2843 = vunpack.c.l.b16 %v2805
  %v2844 = vunpack.c.l.b16 %v2806
  %v2845 = vunpack.c.l.b16 %v2807
  %v2846 = vunpack.c.l.b16 %v2808
  %v2847 = vunpack.c.l.b16 %v2809
  %v2848 = vunpack.c.l.b16 %v2810
  %v2849 = vunpack.c.l.b16 %v2811
  %v2850 = vunpack.c.l.b16 %v2812
  %v2851 = vunpack.c.l.b16 %v2813
  %v2852 = vunpack.c.l.b16 %v2814
  %v2853 = vpack.c.b16 %v2838, %v2837
  %v2854 = vpack.c.b16 %v2840, %v2839
  %v2855 = vpack.c.b16 %v2842, %v2841
  %v2856 = vpack.c.b16 %v2844, %v2843
  %v2857 = vpack.c.b16 %v2846, %v2845
  %v2858 = vpack.c.b16 %v2848, %v2847
  %v2859 = vpack.c.b16 %v2850, %v2849
  %v2860 = vpack.c.b16 %v2852, %v2851
  %2869 = vmatpush.bf16.msra.mxu0 %v2860
  %2870 = vmatpush.bf16.msra.mxu0 %v2859
  %2871 = vmatpush.bf16.msra.mxu0 %v2858
  %2872 = vmatpush.bf16.msra.mxu0 %v2857
  %2873 = vmatpush.bf16.msra.mxu0 %v2856
  %2874 = vmatpush.bf16.msra.mxu0 %v2855
  %2875 = vmatpush.bf16.msra.mxu0 %v2854
  %2876 = vmatpush.bf16.msra.mxu0 %v2853
  %2877 = vmatmul.bf16.gmra.mxu0 %v2819
  %v2878 = vpop.f32.mrf.mxu0
  %v2879 = vadd.f32 0.0, %v2878
  %v2880 = vpop.f32.mrf.mxu0
  %v2881 = vadd.f32 0.0, %v2880
  %2882 = vdwg.mxu0
  %v2883 = vadd.f32 %v2796, %v2879
  %v2884 = vadd.f32 %v2797, %v2881
  %v2885 = vld [vmem:[%s6] sm:$0x1]
  %v2887 = vperm.slane %v2885, 0
  %v2889 = vadd.f32 %v2883, %v2887
  %v2890 = vadd.f32 %v2884, %v2887
  %v2891 = vmax.f32 %v2889, 0.0
  %v2892 = vmax.f32 %v2890, 0.0
  %v2893 = vpack.c.bf16 %v2892, %v2891
  %v2894 = vld [vmem:[%s7] sm:$0xf]
  %v2895 = vld [vmem:[%s7 + $0x4] sm:$0xf]
  %v2896 = vld [vmem:[%s7 + $0x8] sm:$0xf]
  %v2897 = vld [vmem:[%s7 + $0xc] sm:$0xf]
  %v2898 = vld [vmem:[%s7 + $0x10] sm:$0xf]
  %v2899 = vld [vmem:[%s7 + $0x14] sm:$0xf]
  %v2900 = vld [vmem:[%s7 + $0x18] sm:$0xf]
  %v2901 = vld [vmem:[%s7 + $0x1c] sm:$0xf]
  %v2902 = vld [vmem:[%s7 + $0x20] sm:$0xf]
  %v2903 = vld [vmem:[%s7 + $0x24] sm:$0xf]
  %v2904 = vld [vmem:[%s7 + $0x28] sm:$0xf]
  %v2905 = vld [vmem:[%s7 + $0x2c] sm:$0xf]
  %v2906 = vld [vmem:[%s7 + $0x30] sm:$0xf]
  %v2907 = vld [vmem:[%s7 + $0x34] sm:$0xf]
  %v2908 = vld [vmem:[%s7 + $0x38] sm:$0xf]
  %v2909 = vld [vmem:[%s7 + $0x3c] sm:$0xf]
  %v2910 = vld [vmem:[%s8] sm:$0x1]
  %v2912 = vperm.slane %v2910, 0
  %v2930 = vunpack.c.l.b16 %v2894
  %v2931 = vunpack.c.l.b16 %v2895
  %v2932 = vunpack.c.l.b16 %v2896
  %v2933 = vunpack.c.l.b16 %v2897
  %v2934 = vunpack.c.l.b16 %v2898
  %v2935 = vunpack.c.l.b16 %v2899
  %v2936 = vunpack.c.l.b16 %v2900
  %v2937 = vunpack.c.l.b16 %v2901
  %v2938 = vunpack.c.l.b16 %v2902
  %v2939 = vunpack.c.l.b16 %v2903
  %v2940 = vunpack.c.l.b16 %v2904
  %v2941 = vunpack.c.l.b16 %v2905
  %v2942 = vunpack.c.l.b16 %v2906
  %v2943 = vunpack.c.l.b16 %v2907
  %v2944 = vunpack.c.l.b16 %v2908
  %v2945 = vunpack.c.l.b16 %v2909
  %v2946 = vpack.c.b16 %v2931, %v2930
  %v2947 = vpack.c.b16 %v2933, %v2932
  %v2948 = vpack.c.b16 %v2935, %v2934
  %v2949 = vpack.c.b16 %v2937, %v2936
  %v2950 = vpack.c.b16 %v2939, %v2938
  %v2951 = vpack.c.b16 %v2941, %v2940
  %v2952 = vpack.c.b16 %v2943, %v2942
  %v2953 = vpack.c.b16 %v2945, %v2944
  %2962 = vmatpush.bf16.msra.mxu0 %v2953
  %2963 = vmatpush.bf16.msra.mxu0 %v2952
  %2964 = vmatpush.bf16.msra.mxu0 %v2951
  %2965 = vmatpush.bf16.msra.mxu0 %v2950
  %2966 = vmatpush.bf16.msra.mxu0 %v2949
  %2967 = vmatpush.bf16.msra.mxu0 %v2948
  %2968 = vmatpush.bf16.msra.mxu0 %v2947
  %2969 = vmatpush.bf16.msra.mxu0 %v2946
  %2970 = vmatmul.bf16.gmra.mxu0 %v2893
  %v2971 = vpop.f32.mrf.mxu0
  %v2972 = vadd.f32 %v2912, %v2971
  %v2973 = vpop.f32.mrf.mxu0
  %v2974 = vadd.f32 %v2912, %v2973
  %2975 = vdwg.mxu0
  %vm2976 = vcmask 80896
  %v2977 = vsel %vm2976, %v2972, -inf
  %2978 = vmax.xlane.f32.xlu0 %v2977
  %v2979 = vpop.xlane.xlu0 %2978
  %v2980 = vsel %vm2976, %v2974, -inf
  %2981 = vmax.xlane.f32.xlu0 %v2980
  %v2982 = vpop.xlane.xlu0 %2981
  %v2983 = vsub.f32 %v2972, %v2979
  %v2984 = vsub.f32 %v2974, %v2982
  %v2985 = vmul.f32 %v2983, 1.442695
  %v2986 = vpow.pop %v2985
  %v2987 = vmul.f32 %v2984, 1.442695
  %v2988 = vpow.pop %v2987
  %v2989 = vsel %vm2976, %v2986, 0.0
  %2990 = vadd.xlane.f32.xlu0 %v2989
  %v2991 = vpop.xlane.xlu0 %2990
  %v2992 = vsel %vm2976, %v2988, 0.0
  %2993 = vadd.xlane.f32.xlu0 %v2992
  %v2994 = vpop.xlane.xlu0 %2993
  %v2995 = vlog2.pop %v2991
  %v2996 = vmul.f32 %v2995, 0.6931472
  %v2997 = vlog2.pop %v2994
  %v2998 = vmul.f32 %v2997, 0.6931472
  %v2999 = vsub.f32 %v2983, %v2996
  %v3000 = vsub.f32 %v2984, %v2998
  %3001 = vst.msk [vmem:[%s9] sm:$0xff] %vm2976, %v2999
  %3002 = vst.msk [vmem:[%s9 + $0x8] sm:$0xff] %vm2976, %v3000
  // Predicated region
  $region38: #{net_forward.1} parent=0 // pred_check
    _
  $region39: #{net_forward.1} parent=0 // pred_check_branch
    %3004 = sbr.rel (0) target = $region41
  $region40: #{net_forward.1} parent=0 // pred_region
    _
  $region41: #{net_forward.1} parent=0 // pred_fallthru
    _
  // Predicated region
  $region42: #{net_forward.1} parent=0 // pred_check
    _
  $region43: #{net_forward.1} parent=0 // pred_check_branch
    %3006 = sbr.rel (0) target = $region45
  $region44: #{net_forward.1} parent=0 // pred_region
    _
  $region45: #{net_forward.1} parent=0 // pred_fallthru
    _

</llo_original>
